<compile_context>
chip_gen: v7x
topology: tpu7x:2x2x1
jax: 0.10.0
libtpu: 0.0.40
codegen_flags: <defaults>
</compile_context>

<pallas_src>
import functools
import math

import jax
import jax.numpy as jnp
from jax import lax
from jax.experimental import pallas as pl
from jax.experimental.pallas import tpu as pltpu


def kernel_size(in_channel):
    k = int((math.log2(in_channel) + 1) // 2)
    if k % 2 == 0:
        return k + 1
    else:
        return k


_SK = 7          # spatial conv kernel size (fixed by the module)
_SP = _SK // 2   # spatial conv padding


def _mfab_kernel(cw_ref, sw_ref, b_ref, mask_ref, t1_ref, t2_ref, out_ref, *, W, K):
    f32 = jnp.float32
    t1 = t1_ref[...].astype(f32)                        # (Bt, C, HW), lane-dense
    t2 = t2_ref[...].astype(f32)
    Bt, C, HW = t1.shape
    P = K // 2
    Xext = HW + 2 * _SP * W                             # extended flat output range

    # ---------------- channel attention (difference Conv1d, 4 -> 1) ----------
    cpool = jnp.concatenate([
        jnp.mean(t1, axis=2, keepdims=True),
        jnp.max(t1, axis=2, keepdims=True),
        jnp.mean(t2, axis=2, keepdims=True),
        jnp.max(t2, axis=2, keepdims=True)], axis=2)    # (Bt, C, 4)
    zc = jnp.zeros((Bt, P, 4), f32)
    cpool_p = jnp.concatenate([zc, cpool, zc], axis=1)  # (Bt, C + 2P, 4)

    cw = cw_ref[...]                                    # (>=8, 128): row j = tap, lanes 0..3 = pool channel
    acc_c = jnp.zeros((Bt, C, 4), f32)
    for j in range(K):
        win = lax.slice_in_dim(cpool_p, j, j + C, axis=1)            # (Bt, C, 4)
        acc_c = acc_c + cw[j:j + 1, 0:4].reshape(1, 1, 4) * win
    ch_diff = jnp.sum(acc_c, axis=2, keepdims=True) + b_ref[0]       # (Bt, C, 1)
    ch_att1 = 1.0 / (1.0 + jnp.exp(-ch_diff))                        # exact sigmoid
    ch_att2 = 1.0 - ch_att1

    # ---------------- spatial attention (difference Conv2d 7x7, 4 -> 1) ------
    sp = jnp.concatenate([
        jnp.mean(t1, axis=1, keepdims=True),
        jnp.max(t1, axis=1, keepdims=True),
        jnp.mean(t2, axis=1, keepdims=True),
        jnp.max(t2, axis=1, keepdims=True)], axis=1)    # (Bt, 4, HW)

    # Zero-padded flat copy: a 2-D shift (dy, dx) equals a flat shift by
    # dy*W + dx provided columns that would wrap across a row are masked.
    padf = _SP * W + _SP
    zf = jnp.zeros((Bt, 4, padf), f32)
    spp = jnp.concatenate([zf, sp, zf], axis=2)         # (Bt, 4, HW + 2*padf)

    sw = sw_ref[...]                                    # (8, 128): rows 0..3 = pool channel, lane = tap
    mask = mask_ref[...]                                # (8, Xext): row dxi = column-validity mask

    # 7 column-masked, dx-shifted copies over the extended range so the 49
    # tap windows below are pure static slices (no selects inside the loop).
    m_dx = []
    for dxi in range(_SK):                              # dx = dxi - _SP
        shifted = lax.slice_in_dim(spp, dxi, dxi + Xext, axis=2)      # (Bt, 4, Xext)
        m_dx.append(shifted * mask[dxi:dxi + 1, :].reshape(1, 1, Xext))

    acc_s = jnp.zeros((Bt, 4, HW), f32)
    for dyi in range(_SK):                              # dy = dyi - _SP
        off = dyi * W
        for dxi in range(_SK):
            tap = lax.slice_in_dim(m_dx[dxi], off, off + HW, axis=2)  # (Bt, 4, HW)
            t = dyi * _SK + dxi
            acc_s = acc_s + sw[0:4, t:t + 1].reshape(1, 4, 1) * tap
    sp_diff = jnp.sum(acc_s, axis=1, keepdims=True) + b_ref[1]        # (Bt, 1, HW)
    sp_att1 = 1.0 / (1.0 + jnp.exp(-sp_diff))
    sp_att2 = 1.0 - sp_att1

    # ---------------- fuse (lane-dense elementwise) ---------------------------
    a1 = ch_att1 + sp_att1 + 1.0                        # (Bt, C, HW)
    a2 = ch_att2 + sp_att2 + 1.0
    out_ref[...] = (a1 * t1 + a2 * t2).astype(out_ref.dtype)


def modal_fusion_attention_block(t1, t2, params):
    cw1, cw2, sw1, sw2, biases = params
    B, C, H, W = t1.shape
    HW = H * W
    K = cw1.shape[1]
    Xext = HW + 2 * _SP * W

    # Lane-dense layout: last dim is H*W.
    # TODO(synk): if H*W is not a multiple of 128, pad HW (with masked pooling)
    # to keep the fuse stores unmasked; the current code stays correct but
    # falls back to masked partial stores in that case.
    t1f = t1.reshape(B, C, HW)
    t2f = t2.reshape(B, C, HW)

    # --- weight-difference fold (softmax over 2 == sigmoid of logit diff) ----
    cw_diff = (cw1 - cw2).astype(jnp.float32)            # (4, K)
    sw_diff = (sw1 - sw2).astype(jnp.float32)            # (4, 49)
    b_diff = jnp.stack([biases[0] - biases[1],
                        biases[2] - biases[3]]).astype(jnp.float32)   # (2,)

    k_rows = max(8, ((K + 7) // 8) * 8)
    cw_pad = jnp.zeros((k_rows, 128), jnp.float32).at[:K, :4].set(cw_diff.T)
    sw_pad = jnp.zeros((8, 128), jnp.float32).at[:4, :_SK * _SK].set(sw_diff)

    # Column-validity masks over the extended flat range (grid-invariant,
    # precomputed on the host so the kernel has no iota/mod/compare work).
    col = jnp.arange(Xext, dtype=jnp.int32) % W
    rows = [((col + dx >= 0) & (col + dx < W)).astype(jnp.float32)
            for dx in range(-_SP, _SP + 1)]
    mask = jnp.zeros((8, Xext), jnp.float32).at[:_SK, :].set(jnp.stack(rows))

    # --- batch tiling: several batches per grid step to amortize overhead ----
    bytes_per_batch = C * HW * t1.dtype.itemsize
    Bt = 1
    for cand in range(min(B, 8), 0, -1):
        if B % cand == 0 and cand * bytes_per_batch <= (1 << 19):
            Bt = cand
            break
    grid = (B // Bt,)

    blk = pl.BlockSpec((Bt, C, HW), lambda b: (b, 0, 0))
    cwspec = pl.BlockSpec(cw_pad.shape, lambda b: (0, 0))
    swspec = pl.BlockSpec(sw_pad.shape, lambda b: (0, 0))
    mspec = pl.BlockSpec(mask.shape, lambda b: (0, 0))
    smem = pl.BlockSpec(memory_space=pltpu.MemorySpace.SMEM)

    kern = functools.partial(_mfab_kernel, W=W, K=K)
    out = pl.pallas_call(
        kern,
        out_shape=jax.ShapeDtypeStruct((B, C, HW), t1.dtype),
        grid=grid,
        in_specs=[cwspec, swspec, smem, mspec, blk, blk],
        out_specs=blk,
        compiler_params=pltpu.CompilerParams(
            dimension_semantics=("parallel",),
            vmem_limit_bytes=32 * 1024 * 1024),
    )(cw_pad, sw_pad, b_diff, mask, t1f, t2f)
    return out.reshape(B, C, H, W)


def reference(t1, t2, cw1, cw2, sw1, sw2, biases, k):
    """Pure-JAX reference mirroring the PyTorch forward."""
    p = k // 2
    hp = lax.Precision.HIGHEST
    dn = ('NCHW', 'OIHW', 'NCHW')

    a1 = jnp.mean(t1, axis=(2, 3), keepdims=True)
    m1 = jnp.max(t1, axis=(2, 3), keepdims=True)
    a2 = jnp.mean(t2, axis=(2, 3), keepdims=True)
    m2 = jnp.max(t2, axis=(2, 3), keepdims=True)
    channel_pool = jnp.concatenate([a1, m1, a2, m2], axis=2)[..., 0]   # (B,C,4)
    channel_pool = jnp.transpose(channel_pool, (0, 2, 1))[..., None]   # (B,4,C,1)
    w1 = cw1.reshape(1, 4, k, 1)
    w2 = cw2.reshape(1, 4, k, 1)
    ca1 = lax.conv_general_dilated(channel_pool, w1, (1, 1), [(p, p), (0, 0)],
                                   dimension_numbers=dn, precision=hp)[..., 0] + biases[0]
    ca2 = lax.conv_general_dilated(channel_pool, w2, (1, 1), [(p, p), (0, 0)],
                                   dimension_numbers=dn, precision=hp)[..., 0] + biases[1]
    ch_stack = jax.nn.softmax(jnp.stack([ca1, ca2], axis=0), axis=0)   # (2,B,1,C)
    ch_stack = jnp.swapaxes(ch_stack, -1, -2)[..., None]               # (2,B,C,1,1)

    sp = jnp.concatenate([
        jnp.mean(t1, axis=1, keepdims=True), jnp.max(t1, axis=1, keepdims=True),
        jnp.mean(t2, axis=1, keepdims=True), jnp.max(t2, axis=1, keepdims=True)],
        axis=1)                                                        # (B,4,H,W)
    sw1_ = sw1.reshape(1, 4, 7, 7)
    sw2_ = sw2.reshape(1, 4, 7, 7)
    sa1 = lax.conv_general_dilated(sp, sw1_, (1, 1), [(3, 3), (3, 3)],
                                   dimension_numbers=dn, precision=hp) + biases[2]
    sa2 = lax.conv_general_dilated(sp, sw2_, (1, 1), [(3, 3), (3, 3)],
                                   dimension_numbers=dn, precision=hp) + biases[3]
    sp_stack = jax.nn.softmax(jnp.stack([sa1, sa2], axis=0), axis=0)   # (2,B,1,H,W)

    att = ch_stack + sp_stack + 1.0                                    # (2,B,C,H,W)
    return att[0] * t1 + att[1] * t2


if __name__ == "__main__":
    B, C, H, W = 2, 16, 16, 16
    k = kernel_size(C)   # = 3 for C=16

    key = jax.random.PRNGKey(0)
    kt1, kt2, k1, k2, k3, k4, kb = jax.random.split(key, 7)
    t1 = jax.random.normal(kt1, (B, C, H, W), jnp.float32)
    t2 = jax.random.normal(kt2, (B, C, H, W), jnp.float32)

    # Deterministic synthetic parameters (shapes from the module __init__):
    #  channel_conv{1,2}: Conv1d(4->1, kernel=k)  -> weight (4,k), bias scalar
    #  spatial_conv{1,2}: Conv2d(4->1, 7x7)       -> weight (4,49), bias scalar
    cw1 = 0.3 * jax.random.normal(k1, (4, k), jnp.float32)
    cw2 = 0.3 * jax.random.normal(k2, (4, k), jnp.float32)
    sw1 = 0.1 * jax.random.normal(k3, (4, 49), jnp.float32)
    sw2 = 0.1 * jax.random.normal(k4, (4, 49), jnp.float32)
    biases = 0.1 * jax.random.normal(kb, (4,), jnp.float32)  # [cb1, cb2, sb1, sb2]

    out = modal_fusion_attention_block(t1, t2, (cw1, cw2, sw1, sw2, biases))
    out = jax.block_until_ready(out)

    ref = jax.block_until_ready(reference(t1, t2, cw1, cw2, sw1, sw2, biases, k))
    assert out.shape == (B, C, H, W)
    if not bool(jnp.allclose(out, ref, rtol=1e-3, atol=1e-3)):
        max_err = float(jnp.max(jnp.abs(out - ref)))
        raise AssertionError(f"Pallas kernel mismatch vs reference, max_err={max_err}")
    print("KERNEL_OK")
</pallas_src>

<mosaic_0001>
module attributes {stable_mosaic.version = 11 : i64} {
  func.func @_mfab_kernel(%arg0: i32, %arg1: memref<8x128xf32, #tpu.memory_space<vmem>>, %arg2: memref<8x128xf32, #tpu.memory_space<vmem>>, %arg3: memref<2xf32, #tpu.memory_space<smem>>, %arg4: memref<8x352xf32, #tpu.memory_space<vmem>>, %arg5: memref<2x16x256xf32, #tpu.memory_space<vmem>>, %arg6: memref<2x16x256xf32, #tpu.memory_space<vmem>>, %arg7: memref<2x16x256xf32, #tpu.memory_space<vmem>>) attributes {dimension_semantics = [#tpu.dimension_semantics<parallel>], iteration_bounds = array<i64: 1>, scalar_prefetch = 0 : i64, scratch_operands = 0 : i64, tpu.core_type = #tpu.core_type<tc>, window_params = [{pipeline_mode = #tpu.pipeline_mode<synchronous>, transform_indices = @transform_0, window_bounds = array<i64: 8, 128>}, {pipeline_mode = #tpu.pipeline_mode<synchronous>, transform_indices = @transform_1, window_bounds = array<i64: 8, 128>}, {transform_indices = @transform_2, window_bounds = array<i64: 2>}, {pipeline_mode = #tpu.pipeline_mode<synchronous>, transform_indices = @transform_3, window_bounds = array<i64: 8, 352>}, {transform_indices = @transform_4, window_bounds = array<i64: 2, 16, 256>}, {transform_indices = @transform_5, window_bounds = array<i64: 2, 16, 256>}, {transform_indices = @transform_6, window_bounds = array<i64: 2, 16, 256>}]} {
    %c0 = arith.constant 0 : index
    %c0_0 = arith.constant 0 : index
    %c0_1 = arith.constant 0 : index
    %0 = vector.load %arg5[%c0, %c0_0, %c0_1] : memref<2x16x256xf32, #tpu.memory_space<vmem>>, vector<2x16x256xf32>
    %c0_2 = arith.constant 0 : index
    %c0_3 = arith.constant 0 : index
    %c0_4 = arith.constant 0 : index
    %1 = vector.load %arg6[%c0_2, %c0_3, %c0_4] : memref<2x16x256xf32, #tpu.memory_space<vmem>>, vector<2x16x256xf32>
    %cst = arith.constant dense<0.000000e+00> : vector<2x16xf32>
    %2 = vector.multi_reduction <add>, %0, %cst [2] : vector<2x16x256xf32> to vector<2x16xf32>
    %3 = vector.shape_cast %2 : vector<2x16xf32> to vector<2x16x1xf32>
    %cst_5 = arith.constant 2.560000e+02 : f32
    %4 = vector.broadcast %cst_5 : f32 to vector<2x16x1xf32>
    %5 = arith.divf %3, %4 : vector<2x16x1xf32>
    %cst_6 = arith.constant dense<0xFF800000> : vector<2x16xf32>
    %6 = vector.multi_reduction <maximumf>, %0, %cst_6 [2] : vector<2x16x256xf32> to vector<2x16xf32>
    %7 = vector.shape_cast %6 : vector<2x16xf32> to vector<2x16x1xf32>
    %cst_7 = arith.constant dense<0.000000e+00> : vector<2x16xf32>
    %8 = vector.multi_reduction <add>, %1, %cst_7 [2] : vector<2x16x256xf32> to vector<2x16xf32>
    %9 = vector.shape_cast %8 : vector<2x16xf32> to vector<2x16x1xf32>
    %cst_8 = arith.constant 2.560000e+02 : f32
    %10 = vector.broadcast %cst_8 : f32 to vector<2x16x1xf32>
    %11 = arith.divf %9, %10 : vector<2x16x1xf32>
    %cst_9 = arith.constant dense<0xFF800000> : vector<2x16xf32>
    %12 = vector.multi_reduction <maximumf>, %1, %cst_9 [2] : vector<2x16x256xf32> to vector<2x16xf32>
    %13 = vector.shape_cast %12 : vector<2x16xf32> to vector<2x16x1xf32>
    %14 = tpu.concatenate %5, %7, %11, %13 in 2 : vector<2x16x1xf32>, vector<2x16x1xf32>, vector<2x16x1xf32>, vector<2x16x1xf32> -> vector<2x16x4xf32>
    %cst_10 = arith.constant 0.000000e+00 : f32
    %15 = vector.broadcast %cst_10 : f32 to vector<2x1x4xf32>
    %16 = tpu.concatenate %15, %14, %15 in 1 : vector<2x1x4xf32>, vector<2x16x4xf32>, vector<2x1x4xf32> -> vector<2x18x4xf32>
    %c0_11 = arith.constant 0 : index
    %c0_12 = arith.constant 0 : index
    %17 = vector.load %arg1[%c0_11, %c0_12] : memref<8x128xf32, #tpu.memory_space<vmem>>, vector<8x128xf32>
    %cst_13 = arith.constant 0.000000e+00 : f32
    %18 = vector.broadcast %cst_13 : f32 to vector<2x16x4xf32>
    %19 = vector.extract_strided_slice %16 {offsets = [0, 0, 0], sizes = [2, 16, 4], strides = [1, 1, 1]} : vector<2x18x4xf32> to vector<2x16x4xf32>
    %20 = vector.extract_strided_slice %17 {offsets = [0, 0], sizes = [1, 4], strides = [1, 1]} : vector<8x128xf32> to vector<1x4xf32>
    %21 = vector.shape_cast %20 : vector<1x4xf32> to vector<1x1x4xf32>
    %22 = vector.broadcast %21 : vector<1x1x4xf32> to vector<2x16x4xf32>
    %23 = arith.mulf %22, %19 : vector<2x16x4xf32>
    %24 = arith.addf %18, %23 : vector<2x16x4xf32>
    %25 = vector.extract_strided_slice %16 {offsets = [0, 1, 0], sizes = [2, 16, 4], strides = [1, 1, 1]} : vector<2x18x4xf32> to vector<2x16x4xf32>
    %26 = vector.extract_strided_slice %17 {offsets = [1, 0], sizes = [1, 4], strides = [1, 1]} : vector<8x128xf32> to vector<1x4xf32>
    %27 = vector.shape_cast %26 : vector<1x4xf32> to vector<1x1x4xf32>
    %28 = vector.broadcast %27 : vector<1x1x4xf32> to vector<2x16x4xf32>
    %29 = arith.mulf %28, %25 : vector<2x16x4xf32>
    %30 = arith.addf %24, %29 : vector<2x16x4xf32>
    %31 = vector.extract_strided_slice %16 {offsets = [0, 2, 0], sizes = [2, 16, 4], strides = [1, 1, 1]} : vector<2x18x4xf32> to vector<2x16x4xf32>
    %32 = vector.extract_strided_slice %17 {offsets = [2, 0], sizes = [1, 4], strides = [1, 1]} : vector<8x128xf32> to vector<1x4xf32>
    %33 = vector.shape_cast %32 : vector<1x4xf32> to vector<1x1x4xf32>
    %34 = vector.broadcast %33 : vector<1x1x4xf32> to vector<2x16x4xf32>
    %35 = arith.mulf %34, %31 : vector<2x16x4xf32>
    %36 = arith.addf %30, %35 : vector<2x16x4xf32>
    %cst_14 = arith.constant dense<0.000000e+00> : vector<2x16xf32>
    %37 = vector.multi_reduction <add>, %36, %cst_14 [2] : vector<2x16x4xf32> to vector<2x16xf32>
    %38 = vector.shape_cast %37 : vector<2x16xf32> to vector<2x16x1xf32>
    %c0_15 = arith.constant 0 : index
    %39 = memref.load %arg3[%c0_15] : memref<2xf32, #tpu.memory_space<smem>>
    %40 = vector.broadcast %39 : f32 to vector<2x16x1xf32>
    %41 = arith.addf %38, %40 : vector<2x16x1xf32>
    %cst_16 = arith.constant 0.000000e+00 : f32
    %42 = vector.broadcast %cst_16 : f32 to vector<2x16x1xf32>
    %43 = arith.subf %42, %41 : vector<2x16x1xf32>
    %44 = math.exp %43 : vector<2x16x1xf32>
    %cst_17 = arith.constant 1.000000e+00 : f32
    %45 = vector.broadcast %cst_17 : f32 to vector<2x16x1xf32>
    %46 = arith.addf %45, %44 : vector<2x16x1xf32>
    %cst_18 = arith.constant 1.000000e+00 : f32
    %47 = vector.broadcast %cst_18 : f32 to vector<2x16x1xf32>
    %48 = arith.divf %47, %46 : vector<2x16x1xf32>
    %cst_19 = arith.constant 1.000000e+00 : f32
    %49 = vector.broadcast %cst_19 : f32 to vector<2x16x1xf32>
    %50 = arith.subf %49, %48 : vector<2x16x1xf32>
    %cst_20 = arith.constant dense<0.000000e+00> : vector<2x256xf32>
    %51 = vector.multi_reduction <add>, %0, %cst_20 [1] : vector<2x16x256xf32> to vector<2x256xf32>
    %52 = vector.shape_cast %51 : vector<2x256xf32> to vector<2x1x256xf32>
    %cst_21 = arith.constant 1.600000e+01 : f32
    %53 = vector.broadcast %cst_21 : f32 to vector<2x1x256xf32>
    %54 = arith.divf %52, %53 : vector<2x1x256xf32>
    %cst_22 = arith.constant dense<0xFF800000> : vector<2x256xf32>
    %55 = vector.multi_reduction <maximumf>, %0, %cst_22 [1] : vector<2x16x256xf32> to vector<2x256xf32>
    %56 = vector.shape_cast %55 : vector<2x256xf32> to vector<2x1x256xf32>
    %cst_23 = arith.constant dense<0.000000e+00> : vector<2x256xf32>
    %57 = vector.multi_reduction <add>, %1, %cst_23 [1] : vector<2x16x256xf32> to vector<2x256xf32>
    %58 = vector.shape_cast %57 : vector<2x256xf32> to vector<2x1x256xf32>
    %cst_24 = arith.constant 1.600000e+01 : f32
    %59 = vector.broadcast %cst_24 : f32 to vector<2x1x256xf32>
    %60 = arith.divf %58, %59 : vector<2x1x256xf32>
    %cst_25 = arith.constant dense<0xFF800000> : vector<2x256xf32>
    %61 = vector.multi_reduction <maximumf>, %1, %cst_25 [1] : vector<2x16x256xf32> to vector<2x256xf32>
    %62 = vector.shape_cast %61 : vector<2x256xf32> to vector<2x1x256xf32>
    %63 = tpu.concatenate %54, %56, %60, %62 in 1 : vector<2x1x256xf32>, vector<2x1x256xf32>, vector<2x1x256xf32>, vector<2x1x256xf32> -> vector<2x4x256xf32>
    %cst_26 = arith.constant 0.000000e+00 : f32
    %64 = vector.broadcast %cst_26 : f32 to vector<2x4x51xf32>
    %65 = tpu.concatenate %64, %63, %64 in 2 : vector<2x4x51xf32>, vector<2x4x256xf32>, vector<2x4x51xf32> -> vector<2x4x358xf32>
    %c0_27 = arith.constant 0 : index
    %c0_28 = arith.constant 0 : index
    %66 = vector.load %arg2[%c0_27, %c0_28] : memref<8x128xf32, #tpu.memory_space<vmem>>, vector<8x128xf32>
    %c0_29 = arith.constant 0 : index
    %c0_30 = arith.constant 0 : index
    %67 = vector.load %arg4[%c0_29, %c0_30] : memref<8x352xf32, #tpu.memory_space<vmem>>, vector<8x352xf32>
    %68 = vector.extract_strided_slice %65 {offsets = [0, 0, 0], sizes = [2, 4, 352], strides = [1, 1, 1]} : vector<2x4x358xf32> to vector<2x4x352xf32>
    %69 = vector.extract_strided_slice %67 {offsets = [0, 0], sizes = [1, 352], strides = [1, 1]} : vector<8x352xf32> to vector<1x352xf32>
    %70 = vector.shape_cast %69 : vector<1x352xf32> to vector<1x1x352xf32>
    %71 = vector.broadcast %70 : vector<1x1x352xf32> to vector<2x4x352xf32>
    %72 = arith.mulf %68, %71 : vector<2x4x352xf32>
    %73 = vector.extract_strided_slice %65 {offsets = [0, 0, 1], sizes = [2, 4, 352], strides = [1, 1, 1]} : vector<2x4x358xf32> to vector<2x4x352xf32>
    %74 = vector.extract_strided_slice %67 {offsets = [1, 0], sizes = [1, 352], strides = [1, 1]} : vector<8x352xf32> to vector<1x352xf32>
    %75 = vector.shape_cast %74 : vector<1x352xf32> to vector<1x1x352xf32>
    %76 = vector.broadcast %75 : vector<1x1x352xf32> to vector<2x4x352xf32>
    %77 = arith.mulf %73, %76 : vector<2x4x352xf32>
    %78 = vector.extract_strided_slice %65 {offsets = [0, 0, 2], sizes = [2, 4, 352], strides = [1, 1, 1]} : vector<2x4x358xf32> to vector<2x4x352xf32>
    %79 = vector.extract_strided_slice %67 {offsets = [2, 0], sizes = [1, 352], strides = [1, 1]} : vector<8x352xf32> to vector<1x352xf32>
    %80 = vector.shape_cast %79 : vector<1x352xf32> to vector<1x1x352xf32>
    %81 = vector.broadcast %80 : vector<1x1x352xf32> to vector<2x4x352xf32>
    %82 = arith.mulf %78, %81 : vector<2x4x352xf32>
    %83 = vector.extract_strided_slice %65 {offsets = [0, 0, 3], sizes = [2, 4, 352], strides = [1, 1, 1]} : vector<2x4x358xf32> to vector<2x4x352xf32>
    %84 = vector.extract_strided_slice %67 {offsets = [3, 0], sizes = [1, 352], strides = [1, 1]} : vector<8x352xf32> to vector<1x352xf32>
    %85 = vector.shape_cast %84 : vector<1x352xf32> to vector<1x1x352xf32>
    %86 = vector.broadcast %85 : vector<1x1x352xf32> to vector<2x4x352xf32>
    %87 = arith.mulf %83, %86 : vector<2x4x352xf32>
    %88 = vector.extract_strided_slice %65 {offsets = [0, 0, 4], sizes = [2, 4, 352], strides = [1, 1, 1]} : vector<2x4x358xf32> to vector<2x4x352xf32>
    %89 = vector.extract_strided_slice %67 {offsets = [4, 0], sizes = [1, 352], strides = [1, 1]} : vector<8x352xf32> to vector<1x352xf32>
    %90 = vector.shape_cast %89 : vector<1x352xf32> to vector<1x1x352xf32>
    %91 = vector.broadcast %90 : vector<1x1x352xf32> to vector<2x4x352xf32>
    %92 = arith.mulf %88, %91 : vector<2x4x352xf32>
    %93 = vector.extract_strided_slice %65 {offsets = [0, 0, 5], sizes = [2, 4, 352], strides = [1, 1, 1]} : vector<2x4x358xf32> to vector<2x4x352xf32>
    %94 = vector.extract_strided_slice %67 {offsets = [5, 0], sizes = [1, 352], strides = [1, 1]} : vector<8x352xf32> to vector<1x352xf32>
    %95 = vector.shape_cast %94 : vector<1x352xf32> to vector<1x1x352xf32>
    %96 = vector.broadcast %95 : vector<1x1x352xf32> to vector<2x4x352xf32>
    %97 = arith.mulf %93, %96 : vector<2x4x352xf32>
    %98 = vector.extract_strided_slice %65 {offsets = [0, 0, 6], sizes = [2, 4, 352], strides = [1, 1, 1]} : vector<2x4x358xf32> to vector<2x4x352xf32>
    %99 = vector.extract_strided_slice %67 {offsets = [6, 0], sizes = [1, 352], strides = [1, 1]} : vector<8x352xf32> to vector<1x352xf32>
    %100 = vector.shape_cast %99 : vector<1x352xf32> to vector<1x1x352xf32>
    %101 = vector.broadcast %100 : vector<1x1x352xf32> to vector<2x4x352xf32>
    %102 = arith.mulf %98, %101 : vector<2x4x352xf32>
    %cst_31 = arith.constant 0.000000e+00 : f32
    %103 = vector.broadcast %cst_31 : f32 to vector<2x4x256xf32>
    %104 = vector.extract_strided_slice %72 {offsets = [0, 0, 0], sizes = [2, 4, 256], strides = [1, 1, 1]} : vector<2x4x352xf32> to vector<2x4x256xf32>
    %105 = vector.extract_strided_slice %66 {offsets = [0, 0], sizes = [4, 1], strides = [1, 1]} : vector<8x128xf32> to vector<4x1xf32>
    %106 = vector.shape_cast %105 : vector<4x1xf32> to vector<1x4x1xf32>
    %107 = vector.broadcast %106 : vector<1x4x1xf32> to vector<2x4x256xf32>
    %108 = arith.mulf %107, %104 : vector<2x4x256xf32>
    %109 = arith.addf %103, %108 : vector<2x4x256xf32>
    %110 = vector.extract_strided_slice %77 {offsets = [0, 0, 0], sizes = [2, 4, 256], strides = [1, 1, 1]} : vector<2x4x352xf32> to vector<2x4x256xf32>
    %111 = vector.extract_strided_slice %66 {offsets = [0, 1], sizes = [4, 1], strides = [1, 1]} : vector<8x128xf32> to vector<4x1xf32>
    %112 = vector.shape_cast %111 : vector<4x1xf32> to vector<1x4x1xf32>
    %113 = vector.broadcast %112 : vector<1x4x1xf32> to vector<2x4x256xf32>
    %114 = arith.mulf %113, %110 : vector<2x4x256xf32>
    %115 = arith.addf %109, %114 : vector<2x4x256xf32>
    %116 = vector.extract_strided_slice %82 {offsets = [0, 0, 0], sizes = [2, 4, 256], strides = [1, 1, 1]} : vector<2x4x352xf32> to vector<2x4x256xf32>
    %117 = vector.extract_strided_slice %66 {offsets = [0, 2], sizes = [4, 1], strides = [1, 1]} : vector<8x128xf32> to vector<4x1xf32>
    %118 = vector.shape_cast %117 : vector<4x1xf32> to vector<1x4x1xf32>
    %119 = vector.broadcast %118 : vector<1x4x1xf32> to vector<2x4x256xf32>
    %120 = arith.mulf %119, %116 : vector<2x4x256xf32>
    %121 = arith.addf %115, %120 : vector<2x4x256xf32>
    %122 = vector.extract_strided_slice %87 {offsets = [0, 0, 0], sizes = [2, 4, 256], strides = [1, 1, 1]} : vector<2x4x352xf32> to vector<2x4x256xf32>
    %123 = vector.extract_strided_slice %66 {offsets = [0, 3], sizes = [4, 1], strides = [1, 1]} : vector<8x128xf32> to vector<4x1xf32>
    %124 = vector.shape_cast %123 : vector<4x1xf32> to vector<1x4x1xf32>
    %125 = vector.broadcast %124 : vector<1x4x1xf32> to vector<2x4x256xf32>
    %126 = arith.mulf %125, %122 : vector<2x4x256xf32>
    %127 = arith.addf %121, %126 : vector<2x4x256xf32>
    %128 = vector.extract_strided_slice %92 {offsets = [0, 0, 0], sizes = [2, 4, 256], strides = [1, 1, 1]} : vector<2x4x352xf32> to vector<2x4x256xf32>
    %129 = vector.extract_strided_slice %66 {offsets = [0, 4], sizes = [4, 1], strides = [1, 1]} : vector<8x128xf32> to vector<4x1xf32>
    %130 = vector.shape_cast %129 : vector<4x1xf32> to vector<1x4x1xf32>
    %131 = vector.broadcast %130 : vector<1x4x1xf32> to vector<2x4x256xf32>
    %132 = arith.mulf %131, %128 : vector<2x4x256xf32>
    %133 = arith.addf %127, %132 : vector<2x4x256xf32>
    %134 = vector.extract_strided_slice %97 {offsets = [0, 0, 0], sizes = [2, 4, 256], strides = [1, 1, 1]} : vector<2x4x352xf32> to vector<2x4x256xf32>
    %135 = vector.extract_strided_slice %66 {offsets = [0, 5], sizes = [4, 1], strides = [1, 1]} : vector<8x128xf32> to vector<4x1xf32>
    %136 = vector.shape_cast %135 : vector<4x1xf32> to vector<1x4x1xf32>
    %137 = vector.broadcast %136 : vector<1x4x1xf32> to vector<2x4x256xf32>
    %138 = arith.mulf %137, %134 : vector<2x4x256xf32>
    %139 = arith.addf %133, %138 : vector<2x4x256xf32>
    %140 = vector.extract_strided_slice %102 {offsets = [0, 0, 0], sizes = [2, 4, 256], strides = [1, 1, 1]} : vector<2x4x352xf32> to vector<2x4x256xf32>
    %141 = vector.extract_strided_slice %66 {offsets = [0, 6], sizes = [4, 1], strides = [1, 1]} : vector<8x128xf32> to vector<4x1xf32>
    %142 = vector.shape_cast %141 : vector<4x1xf32> to vector<1x4x1xf32>
    %143 = vector.broadcast %142 : vector<1x4x1xf32> to vector<2x4x256xf32>
    %144 = arith.mulf %143, %140 : vector<2x4x256xf32>
    %145 = arith.addf %139, %144 : vector<2x4x256xf32>
    %146 = vector.extract_strided_slice %72 {offsets = [0, 0, 16], sizes = [2, 4, 256], strides = [1, 1, 1]} : vector<2x4x352xf32> to vector<2x4x256xf32>
    %147 = vector.extract_strided_slice %66 {offsets = [0, 7], sizes = [4, 1], strides = [1, 1]} : vector<8x128xf32> to vector<4x1xf32>
    %148 = vector.shape_cast %147 : vector<4x1xf32> to vector<1x4x1xf32>
    %149 = vector.broadcast %148 : vector<1x4x1xf32> to vector<2x4x256xf32>
    %150 = arith.mulf %149, %146 : vector<2x4x256xf32>
    %151 = arith.addf %145, %150 : vector<2x4x256xf32>
    %152 = vector.extract_strided_slice %77 {offsets = [0, 0, 16], sizes = [2, 4, 256], strides = [1, 1, 1]} : vector<2x4x352xf32> to vector<2x4x256xf32>
    %153 = vector.extract_strided_slice %66 {offsets = [0, 8], sizes = [4, 1], strides = [1, 1]} : vector<8x128xf32> to vector<4x1xf32>
    %154 = vector.shape_cast %153 : vector<4x1xf32> to vector<1x4x1xf32>
    %155 = vector.broadcast %154 : vector<1x4x1xf32> to vector<2x4x256xf32>
    %156 = arith.mulf %155, %152 : vector<2x4x256xf32>
    %157 = arith.addf %151, %156 : vector<2x4x256xf32>
    %158 = vector.extract_strided_slice %82 {offsets = [0, 0, 16], sizes = [2, 4, 256], strides = [1, 1, 1]} : vector<2x4x352xf32> to vector<2x4x256xf32>
    %159 = vector.extract_strided_slice %66 {offsets = [0, 9], sizes = [4, 1], strides = [1, 1]} : vector<8x128xf32> to vector<4x1xf32>
    %160 = vector.shape_cast %159 : vector<4x1xf32> to vector<1x4x1xf32>
    %161 = vector.broadcast %160 : vector<1x4x1xf32> to vector<2x4x256xf32>
    %162 = arith.mulf %161, %158 : vector<2x4x256xf32>
    %163 = arith.addf %157, %162 : vector<2x4x256xf32>
    %164 = vector.extract_strided_slice %87 {offsets = [0, 0, 16], sizes = [2, 4, 256], strides = [1, 1, 1]} : vector<2x4x352xf32> to vector<2x4x256xf32>
    %165 = vector.extract_strided_slice %66 {offsets = [0, 10], sizes = [4, 1], strides = [1, 1]} : vector<8x128xf32> to vector<4x1xf32>
    %166 = vector.shape_cast %165 : vector<4x1xf32> to vector<1x4x1xf32>
    %167 = vector.broadcast %166 : vector<1x4x1xf32> to vector<2x4x256xf32>
    %168 = arith.mulf %167, %164 : vector<2x4x256xf32>
    %169 = arith.addf %163, %168 : vector<2x4x256xf32>
    %170 = vector.extract_strided_slice %92 {offsets = [0, 0, 16], sizes = [2, 4, 256], strides = [1, 1, 1]} : vector<2x4x352xf32> to vector<2x4x256xf32>
    %171 = vector.extract_strided_slice %66 {offsets = [0, 11], sizes = [4, 1], strides = [1, 1]} : vector<8x128xf32> to vector<4x1xf32>
    %172 = vector.shape_cast %171 : vector<4x1xf32> to vector<1x4x1xf32>
    %173 = vector.broadcast %172 : vector<1x4x1xf32> to vector<2x4x256xf32>
    %174 = arith.mulf %173, %170 : vector<2x4x256xf32>
    %175 = arith.addf %169, %174 : vector<2x4x256xf32>
    %176 = vector.extract_strided_slice %97 {offsets = [0, 0, 16], sizes = [2, 4, 256], strides = [1, 1, 1]} : vector<2x4x352xf32> to vector<2x4x256xf32>
    %177 = vector.extract_strided_slice %66 {offsets = [0, 12], sizes = [4, 1], strides = [1, 1]} : vector<8x128xf32> to vector<4x1xf32>
    %178 = vector.shape_cast %177 : vector<4x1xf32> to vector<1x4x1xf32>
    %179 = vector.broadcast %178 : vector<1x4x1xf32> to vector<2x4x256xf32>
    %180 = arith.mulf %179, %176 : vector<2x4x256xf32>
    %181 = arith.addf %175, %180 : vector<2x4x256xf32>
    %182 = vector.extract_strided_slice %102 {offsets = [0, 0, 16], sizes = [2, 4, 256], strides = [1, 1, 1]} : vector<2x4x352xf32> to vector<2x4x256xf32>
    %183 = vector.extract_strided_slice %66 {offsets = [0, 13], sizes = [4, 1], strides = [1, 1]} : vector<8x128xf32> to vector<4x1xf32>
    %184 = vector.shape_cast %183 : vector<4x1xf32> to vector<1x4x1xf32>
    %185 = vector.broadcast %184 : vector<1x4x1xf32> to vector<2x4x256xf32>
    %186 = arith.mulf %185, %182 : vector<2x4x256xf32>
    %187 = arith.addf %181, %186 : vector<2x4x256xf32>
    %188 = vector.extract_strided_slice %72 {offsets = [0, 0, 32], sizes = [2, 4, 256], strides = [1, 1, 1]} : vector<2x4x352xf32> to vector<2x4x256xf32>
    %189 = vector.extract_strided_slice %66 {offsets = [0, 14], sizes = [4, 1], strides = [1, 1]} : vector<8x128xf32> to vector<4x1xf32>
    %190 = vector.shape_cast %189 : vector<4x1xf32> to vector<1x4x1xf32>
    %191 = vector.broadcast %190 : vector<1x4x1xf32> to vector<2x4x256xf32>
    %192 = arith.mulf %191, %188 : vector<2x4x256xf32>
    %193 = arith.addf %187, %192 : vector<2x4x256xf32>
    %194 = vector.extract_strided_slice %77 {offsets = [0, 0, 32], sizes = [2, 4, 256], strides = [1, 1, 1]} : vector<2x4x352xf32> to vector<2x4x256xf32>
    %195 = vector.extract_strided_slice %66 {offsets = [0, 15], sizes = [4, 1], strides = [1, 1]} : vector<8x128xf32> to vector<4x1xf32>
    %196 = vector.shape_cast %195 : vector<4x1xf32> to vector<1x4x1xf32>
    %197 = vector.broadcast %196 : vector<1x4x1xf32> to vector<2x4x256xf32>
    %198 = arith.mulf %197, %194 : vector<2x4x256xf32>
    %199 = arith.addf %193, %198 : vector<2x4x256xf32>
    %200 = vector.extract_strided_slice %82 {offsets = [0, 0, 32], sizes = [2, 4, 256], strides = [1, 1, 1]} : vector<2x4x352xf32> to vector<2x4x256xf32>
    %201 = vector.extract_strided_slice %66 {offsets = [0, 16], sizes = [4, 1], strides = [1, 1]} : vector<8x128xf32> to vector<4x1xf32>
    %202 = vector.shape_cast %201 : vector<4x1xf32> to vector<1x4x1xf32>
    %203 = vector.broadcast %202 : vector<1x4x1xf32> to vector<2x4x256xf32>
    %204 = arith.mulf %203, %200 : vector<2x4x256xf32>
    %205 = arith.addf %199, %204 : vector<2x4x256xf32>
    %206 = vector.extract_strided_slice %87 {offsets = [0, 0, 32], sizes = [2, 4, 256], strides = [1, 1, 1]} : vector<2x4x352xf32> to vector<2x4x256xf32>
    %207 = vector.extract_strided_slice %66 {offsets = [0, 17], sizes = [4, 1], strides = [1, 1]} : vector<8x128xf32> to vector<4x1xf32>
    %208 = vector.shape_cast %207 : vector<4x1xf32> to vector<1x4x1xf32>
    %209 = vector.broadcast %208 : vector<1x4x1xf32> to vector<2x4x256xf32>
    %210 = arith.mulf %209, %206 : vector<2x4x256xf32>
    %211 = arith.addf %205, %210 : vector<2x4x256xf32>
    %212 = vector.extract_strided_slice %92 {offsets = [0, 0, 32], sizes = [2, 4, 256], strides = [1, 1, 1]} : vector<2x4x352xf32> to vector<2x4x256xf32>
    %213 = vector.extract_strided_slice %66 {offsets = [0, 18], sizes = [4, 1], strides = [1, 1]} : vector<8x128xf32> to vector<4x1xf32>
    %214 = vector.shape_cast %213 : vector<4x1xf32> to vector<1x4x1xf32>
    %215 = vector.broadcast %214 : vector<1x4x1xf32> to vector<2x4x256xf32>
    %216 = arith.mulf %215, %212 : vector<2x4x256xf32>
    %217 = arith.addf %211, %216 : vector<2x4x256xf32>
    %218 = vector.extract_strided_slice %97 {offsets = [0, 0, 32], sizes = [2, 4, 256], strides = [1, 1, 1]} : vector<2x4x352xf32> to vector<2x4x256xf32>
    %219 = vector.extract_strided_slice %66 {offsets = [0, 19], sizes = [4, 1], strides = [1, 1]} : vector<8x128xf32> to vector<4x1xf32>
    %220 = vector.shape_cast %219 : vector<4x1xf32> to vector<1x4x1xf32>
    %221 = vector.broadcast %220 : vector<1x4x1xf32> to vector<2x4x256xf32>
    %222 = arith.mulf %221, %218 : vector<2x4x256xf32>
    %223 = arith.addf %217, %222 : vector<2x4x256xf32>
    %224 = vector.extract_strided_slice %102 {offsets = [0, 0, 32], sizes = [2, 4, 256], strides = [1, 1, 1]} : vector<2x4x352xf32> to vector<2x4x256xf32>
    %225 = vector.extract_strided_slice %66 {offsets = [0, 20], sizes = [4, 1], strides = [1, 1]} : vector<8x128xf32> to vector<4x1xf32>
    %226 = vector.shape_cast %225 : vector<4x1xf32> to vector<1x4x1xf32>
    %227 = vector.broadcast %226 : vector<1x4x1xf32> to vector<2x4x256xf32>
    %228 = arith.mulf %227, %224 : vector<2x4x256xf32>
    %229 = arith.addf %223, %228 : vector<2x4x256xf32>
    %230 = vector.extract_strided_slice %72 {offsets = [0, 0, 48], sizes = [2, 4, 256], strides = [1, 1, 1]} : vector<2x4x352xf32> to vector<2x4x256xf32>
    %231 = vector.extract_strided_slice %66 {offsets = [0, 21], sizes = [4, 1], strides = [1, 1]} : vector<8x128xf32> to vector<4x1xf32>
    %232 = vector.shape_cast %231 : vector<4x1xf32> to vector<1x4x1xf32>
    %233 = vector.broadcast %232 : vector<1x4x1xf32> to vector<2x4x256xf32>
    %234 = arith.mulf %233, %230 : vector<2x4x256xf32>
    %235 = arith.addf %229, %234 : vector<2x4x256xf32>
    %236 = vector.extract_strided_slice %77 {offsets = [0, 0, 48], sizes = [2, 4, 256], strides = [1, 1, 1]} : vector<2x4x352xf32> to vector<2x4x256xf32>
    %237 = vector.extract_strided_slice %66 {offsets = [0, 22], sizes = [4, 1], strides = [1, 1]} : vector<8x128xf32> to vector<4x1xf32>
    %238 = vector.shape_cast %237 : vector<4x1xf32> to vector<1x4x1xf32>
    %239 = vector.broadcast %238 : vector<1x4x1xf32> to vector<2x4x256xf32>
    %240 = arith.mulf %239, %236 : vector<2x4x256xf32>
    %241 = arith.addf %235, %240 : vector<2x4x256xf32>
    %242 = vector.extract_strided_slice %82 {offsets = [0, 0, 48], sizes = [2, 4, 256], strides = [1, 1, 1]} : vector<2x4x352xf32> to vector<2x4x256xf32>
    %243 = vector.extract_strided_slice %66 {offsets = [0, 23], sizes = [4, 1], strides = [1, 1]} : vector<8x128xf32> to vector<4x1xf32>
    %244 = vector.shape_cast %243 : vector<4x1xf32> to vector<1x4x1xf32>
    %245 = vector.broadcast %244 : vector<1x4x1xf32> to vector<2x4x256xf32>
    %246 = arith.mulf %245, %242 : vector<2x4x256xf32>
    %247 = arith.addf %241, %246 : vector<2x4x256xf32>
    %248 = vector.extract_strided_slice %87 {offsets = [0, 0, 48], sizes = [2, 4, 256], strides = [1, 1, 1]} : vector<2x4x352xf32> to vector<2x4x256xf32>
    %249 = vector.extract_strided_slice %66 {offsets = [0, 24], sizes = [4, 1], strides = [1, 1]} : vector<8x128xf32> to vector<4x1xf32>
    %250 = vector.shape_cast %249 : vector<4x1xf32> to vector<1x4x1xf32>
    %251 = vector.broadcast %250 : vector<1x4x1xf32> to vector<2x4x256xf32>
    %252 = arith.mulf %251, %248 : vector<2x4x256xf32>
    %253 = arith.addf %247, %252 : vector<2x4x256xf32>
    %254 = vector.extract_strided_slice %92 {offsets = [0, 0, 48], sizes = [2, 4, 256], strides = [1, 1, 1]} : vector<2x4x352xf32> to vector<2x4x256xf32>
    %255 = vector.extract_strided_slice %66 {offsets = [0, 25], sizes = [4, 1], strides = [1, 1]} : vector<8x128xf32> to vector<4x1xf32>
    %256 = vector.shape_cast %255 : vector<4x1xf32> to vector<1x4x1xf32>
    %257 = vector.broadcast %256 : vector<1x4x1xf32> to vector<2x4x256xf32>
    %258 = arith.mulf %257, %254 : vector<2x4x256xf32>
    %259 = arith.addf %253, %258 : vector<2x4x256xf32>
    %260 = vector.extract_strided_slice %97 {offsets = [0, 0, 48], sizes = [2, 4, 256], strides = [1, 1, 1]} : vector<2x4x352xf32> to vector<2x4x256xf32>
    %261 = vector.extract_strided_slice %66 {offsets = [0, 26], sizes = [4, 1], strides = [1, 1]} : vector<8x128xf32> to vector<4x1xf32>
    %262 = vector.shape_cast %261 : vector<4x1xf32> to vector<1x4x1xf32>
    %263 = vector.broadcast %262 : vector<1x4x1xf32> to vector<2x4x256xf32>
    %264 = arith.mulf %263, %260 : vector<2x4x256xf32>
    %265 = arith.addf %259, %264 : vector<2x4x256xf32>
    %266 = vector.extract_strided_slice %102 {offsets = [0, 0, 48], sizes = [2, 4, 256], strides = [1, 1, 1]} : vector<2x4x352xf32> to vector<2x4x256xf32>
    %267 = vector.extract_strided_slice %66 {offsets = [0, 27], sizes = [4, 1], strides = [1, 1]} : vector<8x128xf32> to vector<4x1xf32>
    %268 = vector.shape_cast %267 : vector<4x1xf32> to vector<1x4x1xf32>
    %269 = vector.broadcast %268 : vector<1x4x1xf32> to vector<2x4x256xf32>
    %270 = arith.mulf %269, %266 : vector<2x4x256xf32>
    %271 = arith.addf %265, %270 : vector<2x4x256xf32>
    %272 = vector.extract_strided_slice %72 {offsets = [0, 0, 64], sizes = [2, 4, 256], strides = [1, 1, 1]} : vector<2x4x352xf32> to vector<2x4x256xf32>
    %273 = vector.extract_strided_slice %66 {offsets = [0, 28], sizes = [4, 1], strides = [1, 1]} : vector<8x128xf32> to vector<4x1xf32>
    %274 = vector.shape_cast %273 : vector<4x1xf32> to vector<1x4x1xf32>
    %275 = vector.broadcast %274 : vector<1x4x1xf32> to vector<2x4x256xf32>
    %276 = arith.mulf %275, %272 : vector<2x4x256xf32>
    %277 = arith.addf %271, %276 : vector<2x4x256xf32>
    %278 = vector.extract_strided_slice %77 {offsets = [0, 0, 64], sizes = [2, 4, 256], strides = [1, 1, 1]} : vector<2x4x352xf32> to vector<2x4x256xf32>
    %279 = vector.extract_strided_slice %66 {offsets = [0, 29], sizes = [4, 1], strides = [1, 1]} : vector<8x128xf32> to vector<4x1xf32>
    %280 = vector.shape_cast %279 : vector<4x1xf32> to vector<1x4x1xf32>
    %281 = vector.broadcast %280 : vector<1x4x1xf32> to vector<2x4x256xf32>
    %282 = arith.mulf %281, %278 : vector<2x4x256xf32>
    %283 = arith.addf %277, %282 : vector<2x4x256xf32>
    %284 = vector.extract_strided_slice %82 {offsets = [0, 0, 64], sizes = [2, 4, 256], strides = [1, 1, 1]} : vector<2x4x352xf32> to vector<2x4x256xf32>
    %285 = vector.extract_strided_slice %66 {offsets = [0, 30], sizes = [4, 1], strides = [1, 1]} : vector<8x128xf32> to vector<4x1xf32>
    %286 = vector.shape_cast %285 : vector<4x1xf32> to vector<1x4x1xf32>
    %287 = vector.broadcast %286 : vector<1x4x1xf32> to vector<2x4x256xf32>
    %288 = arith.mulf %287, %284 : vector<2x4x256xf32>
    %289 = arith.addf %283, %288 : vector<2x4x256xf32>
    %290 = vector.extract_strided_slice %87 {offsets = [0, 0, 64], sizes = [2, 4, 256], strides = [1, 1, 1]} : vector<2x4x352xf32> to vector<2x4x256xf32>
    %291 = vector.extract_strided_slice %66 {offsets = [0, 31], sizes = [4, 1], strides = [1, 1]} : vector<8x128xf32> to vector<4x1xf32>
    %292 = vector.shape_cast %291 : vector<4x1xf32> to vector<1x4x1xf32>
    %293 = vector.broadcast %292 : vector<1x4x1xf32> to vector<2x4x256xf32>
    %294 = arith.mulf %293, %290 : vector<2x4x256xf32>
    %295 = arith.addf %289, %294 : vector<2x4x256xf32>
    %296 = vector.extract_strided_slice %92 {offsets = [0, 0, 64], sizes = [2, 4, 256], strides = [1, 1, 1]} : vector<2x4x352xf32> to vector<2x4x256xf32>
    %297 = vector.extract_strided_slice %66 {offsets = [0, 32], sizes = [4, 1], strides = [1, 1]} : vector<8x128xf32> to vector<4x1xf32>
    %298 = vector.shape_cast %297 : vector<4x1xf32> to vector<1x4x1xf32>
    %299 = vector.broadcast %298 : vector<1x4x1xf32> to vector<2x4x256xf32>
    %300 = arith.mulf %299, %296 : vector<2x4x256xf32>
    %301 = arith.addf %295, %300 : vector<2x4x256xf32>
    %302 = vector.extract_strided_slice %97 {offsets = [0, 0, 64], sizes = [2, 4, 256], strides = [1, 1, 1]} : vector<2x4x352xf32> to vector<2x4x256xf32>
    %303 = vector.extract_strided_slice %66 {offsets = [0, 33], sizes = [4, 1], strides = [1, 1]} : vector<8x128xf32> to vector<4x1xf32>
    %304 = vector.shape_cast %303 : vector<4x1xf32> to vector<1x4x1xf32>
    %305 = vector.broadcast %304 : vector<1x4x1xf32> to vector<2x4x256xf32>
    %306 = arith.mulf %305, %302 : vector<2x4x256xf32>
    %307 = arith.addf %301, %306 : vector<2x4x256xf32>
    %308 = vector.extract_strided_slice %102 {offsets = [0, 0, 64], sizes = [2, 4, 256], strides = [1, 1, 1]} : vector<2x4x352xf32> to vector<2x4x256xf32>
    %309 = vector.extract_strided_slice %66 {offsets = [0, 34], sizes = [4, 1], strides = [1, 1]} : vector<8x128xf32> to vector<4x1xf32>
    %310 = vector.shape_cast %309 : vector<4x1xf32> to vector<1x4x1xf32>
    %311 = vector.broadcast %310 : vector<1x4x1xf32> to vector<2x4x256xf32>
    %312 = arith.mulf %311, %308 : vector<2x4x256xf32>
    %313 = arith.addf %307, %312 : vector<2x4x256xf32>
    %314 = vector.extract_strided_slice %72 {offsets = [0, 0, 80], sizes = [2, 4, 256], strides = [1, 1, 1]} : vector<2x4x352xf32> to vector<2x4x256xf32>
    %315 = vector.extract_strided_slice %66 {offsets = [0, 35], sizes = [4, 1], strides = [1, 1]} : vector<8x128xf32> to vector<4x1xf32>
    %316 = vector.shape_cast %315 : vector<4x1xf32> to vector<1x4x1xf32>
    %317 = vector.broadcast %316 : vector<1x4x1xf32> to vector<2x4x256xf32>
    %318 = arith.mulf %317, %314 : vector<2x4x256xf32>
    %319 = arith.addf %313, %318 : vector<2x4x256xf32>
    %320 = vector.extract_strided_slice %77 {offsets = [0, 0, 80], sizes = [2, 4, 256], strides = [1, 1, 1]} : vector<2x4x352xf32> to vector<2x4x256xf32>
    %321 = vector.extract_strided_slice %66 {offsets = [0, 36], sizes = [4, 1], strides = [1, 1]} : vector<8x128xf32> to vector<4x1xf32>
    %322 = vector.shape_cast %321 : vector<4x1xf32> to vector<1x4x1xf32>
    %323 = vector.broadcast %322 : vector<1x4x1xf32> to vector<2x4x256xf32>
    %324 = arith.mulf %323, %320 : vector<2x4x256xf32>
    %325 = arith.addf %319, %324 : vector<2x4x256xf32>
    %326 = vector.extract_strided_slice %82 {offsets = [0, 0, 80], sizes = [2, 4, 256], strides = [1, 1, 1]} : vector<2x4x352xf32> to vector<2x4x256xf32>
    %327 = vector.extract_strided_slice %66 {offsets = [0, 37], sizes = [4, 1], strides = [1, 1]} : vector<8x128xf32> to vector<4x1xf32>
    %328 = vector.shape_cast %327 : vector<4x1xf32> to vector<1x4x1xf32>
    %329 = vector.broadcast %328 : vector<1x4x1xf32> to vector<2x4x256xf32>
    %330 = arith.mulf %329, %326 : vector<2x4x256xf32>
    %331 = arith.addf %325, %330 : vector<2x4x256xf32>
    %332 = vector.extract_strided_slice %87 {offsets = [0, 0, 80], sizes = [2, 4, 256], strides = [1, 1, 1]} : vector<2x4x352xf32> to vector<2x4x256xf32>
    %333 = vector.extract_strided_slice %66 {offsets = [0, 38], sizes = [4, 1], strides = [1, 1]} : vector<8x128xf32> to vector<4x1xf32>
    %334 = vector.shape_cast %333 : vector<4x1xf32> to vector<1x4x1xf32>
    %335 = vector.broadcast %334 : vector<1x4x1xf32> to vector<2x4x256xf32>
    %336 = arith.mulf %335, %332 : vector<2x4x256xf32>
    %337 = arith.addf %331, %336 : vector<2x4x256xf32>
    %338 = vector.extract_strided_slice %92 {offsets = [0, 0, 80], sizes = [2, 4, 256], strides = [1, 1, 1]} : vector<2x4x352xf32> to vector<2x4x256xf32>
    %339 = vector.extract_strided_slice %66 {offsets = [0, 39], sizes = [4, 1], strides = [1, 1]} : vector<8x128xf32> to vector<4x1xf32>
    %340 = vector.shape_cast %339 : vector<4x1xf32> to vector<1x4x1xf32>
    %341 = vector.broadcast %340 : vector<1x4x1xf32> to vector<2x4x256xf32>
    %342 = arith.mulf %341, %338 : vector<2x4x256xf32>
    %343 = arith.addf %337, %342 : vector<2x4x256xf32>
    %344 = vector.extract_strided_slice %97 {offsets = [0, 0, 80], sizes = [2, 4, 256], strides = [1, 1, 1]} : vector<2x4x352xf32> to vector<2x4x256xf32>
    %345 = vector.extract_strided_slice %66 {offsets = [0, 40], sizes = [4, 1], strides = [1, 1]} : vector<8x128xf32> to vector<4x1xf32>
    %346 = vector.shape_cast %345 : vector<4x1xf32> to vector<1x4x1xf32>
    %347 = vector.broadcast %346 : vector<1x4x1xf32> to vector<2x4x256xf32>
    %348 = arith.mulf %347, %344 : vector<2x4x256xf32>
    %349 = arith.addf %343, %348 : vector<2x4x256xf32>
    %350 = vector.extract_strided_slice %102 {offsets = [0, 0, 80], sizes = [2, 4, 256], strides = [1, 1, 1]} : vector<2x4x352xf32> to vector<2x4x256xf32>
    %351 = vector.extract_strided_slice %66 {offsets = [0, 41], sizes = [4, 1], strides = [1, 1]} : vector<8x128xf32> to vector<4x1xf32>
    %352 = vector.shape_cast %351 : vector<4x1xf32> to vector<1x4x1xf32>
    %353 = vector.broadcast %352 : vector<1x4x1xf32> to vector<2x4x256xf32>
    %354 = arith.mulf %353, %350 : vector<2x4x256xf32>
    %355 = arith.addf %349, %354 : vector<2x4x256xf32>
    %356 = vector.extract_strided_slice %72 {offsets = [0, 0, 96], sizes = [2, 4, 256], strides = [1, 1, 1]} : vector<2x4x352xf32> to vector<2x4x256xf32>
    %357 = vector.extract_strided_slice %66 {offsets = [0, 42], sizes = [4, 1], strides = [1, 1]} : vector<8x128xf32> to vector<4x1xf32>
    %358 = vector.shape_cast %357 : vector<4x1xf32> to vector<1x4x1xf32>
    %359 = vector.broadcast %358 : vector<1x4x1xf32> to vector<2x4x256xf32>
    %360 = arith.mulf %359, %356 : vector<2x4x256xf32>
    %361 = arith.addf %355, %360 : vector<2x4x256xf32>
    %362 = vector.extract_strided_slice %77 {offsets = [0, 0, 96], sizes = [2, 4, 256], strides = [1, 1, 1]} : vector<2x4x352xf32> to vector<2x4x256xf32>
    %363 = vector.extract_strided_slice %66 {offsets = [0, 43], sizes = [4, 1], strides = [1, 1]} : vector<8x128xf32> to vector<4x1xf32>
    %364 = vector.shape_cast %363 : vector<4x1xf32> to vector<1x4x1xf32>
    %365 = vector.broadcast %364 : vector<1x4x1xf32> to vector<2x4x256xf32>
    %366 = arith.mulf %365, %362 : vector<2x4x256xf32>
    %367 = arith.addf %361, %366 : vector<2x4x256xf32>
    %368 = vector.extract_strided_slice %82 {offsets = [0, 0, 96], sizes = [2, 4, 256], strides = [1, 1, 1]} : vector<2x4x352xf32> to vector<2x4x256xf32>
    %369 = vector.extract_strided_slice %66 {offsets = [0, 44], sizes = [4, 1], strides = [1, 1]} : vector<8x128xf32> to vector<4x1xf32>
    %370 = vector.shape_cast %369 : vector<4x1xf32> to vector<1x4x1xf32>
    %371 = vector.broadcast %370 : vector<1x4x1xf32> to vector<2x4x256xf32>
    %372 = arith.mulf %371, %368 : vector<2x4x256xf32>
    %373 = arith.addf %367, %372 : vector<2x4x256xf32>
    %374 = vector.extract_strided_slice %87 {offsets = [0, 0, 96], sizes = [2, 4, 256], strides = [1, 1, 1]} : vector<2x4x352xf32> to vector<2x4x256xf32>
    %375 = vector.extract_strided_slice %66 {offsets = [0, 45], sizes = [4, 1], strides = [1, 1]} : vector<8x128xf32> to vector<4x1xf32>
    %376 = vector.shape_cast %375 : vector<4x1xf32> to vector<1x4x1xf32>
    %377 = vector.broadcast %376 : vector<1x4x1xf32> to vector<2x4x256xf32>
    %378 = arith.mulf %377, %374 : vector<2x4x256xf32>
    %379 = arith.addf %373, %378 : vector<2x4x256xf32>
    %380 = vector.extract_strided_slice %92 {offsets = [0, 0, 96], sizes = [2, 4, 256], strides = [1, 1, 1]} : vector<2x4x352xf32> to vector<2x4x256xf32>
    %381 = vector.extract_strided_slice %66 {offsets = [0, 46], sizes = [4, 1], strides = [1, 1]} : vector<8x128xf32> to vector<4x1xf32>
    %382 = vector.shape_cast %381 : vector<4x1xf32> to vector<1x4x1xf32>
    %383 = vector.broadcast %382 : vector<1x4x1xf32> to vector<2x4x256xf32>
    %384 = arith.mulf %383, %380 : vector<2x4x256xf32>
    %385 = arith.addf %379, %384 : vector<2x4x256xf32>
    %386 = vector.extract_strided_slice %97 {offsets = [0, 0, 96], sizes = [2, 4, 256], strides = [1, 1, 1]} : vector<2x4x352xf32> to vector<2x4x256xf32>
    %387 = vector.extract_strided_slice %66 {offsets = [0, 47], sizes = [4, 1], strides = [1, 1]} : vector<8x128xf32> to vector<4x1xf32>
    %388 = vector.shape_cast %387 : vector<4x1xf32> to vector<1x4x1xf32>
    %389 = vector.broadcast %388 : vector<1x4x1xf32> to vector<2x4x256xf32>
    %390 = arith.mulf %389, %386 : vector<2x4x256xf32>
    %391 = arith.addf %385, %390 : vector<2x4x256xf32>
    %392 = vector.extract_strided_slice %102 {offsets = [0, 0, 96], sizes = [2, 4, 256], strides = [1, 1, 1]} : vector<2x4x352xf32> to vector<2x4x256xf32>
    %393 = vector.extract_strided_slice %66 {offsets = [0, 48], sizes = [4, 1], strides = [1, 1]} : vector<8x128xf32> to vector<4x1xf32>
    %394 = vector.shape_cast %393 : vector<4x1xf32> to vector<1x4x1xf32>
    %395 = vector.broadcast %394 : vector<1x4x1xf32> to vector<2x4x256xf32>
    %396 = arith.mulf %395, %392 : vector<2x4x256xf32>
    %397 = arith.addf %391, %396 : vector<2x4x256xf32>
    %cst_32 = arith.constant dense<0.000000e+00> : vector<2x256xf32>
    %398 = vector.multi_reduction <add>, %397, %cst_32 [1] : vector<2x4x256xf32> to vector<2x256xf32>
    %399 = vector.shape_cast %398 : vector<2x256xf32> to vector<2x1x256xf32>
    %c1 = arith.constant 1 : index
    %400 = memref.load %arg3[%c1] : memref<2xf32, #tpu.memory_space<smem>>
    %401 = vector.broadcast %400 : f32 to vector<2x1x256xf32>
    %402 = arith.addf %399, %401 : vector<2x1x256xf32>
    %cst_33 = arith.constant 0.000000e+00 : f32
    %403 = vector.broadcast %cst_33 : f32 to vector<2x1x256xf32>
    %404 = arith.subf %403, %402 : vector<2x1x256xf32>
    %405 = math.exp %404 : vector<2x1x256xf32>
    %cst_34 = arith.constant 1.000000e+00 : f32
    %406 = vector.broadcast %cst_34 : f32 to vector<2x1x256xf32>
    %407 = arith.addf %406, %405 : vector<2x1x256xf32>
    %cst_35 = arith.constant 1.000000e+00 : f32
    %408 = vector.broadcast %cst_35 : f32 to vector<2x1x256xf32>
    %409 = arith.divf %408, %407 : vector<2x1x256xf32>
    %cst_36 = arith.constant 1.000000e+00 : f32
    %410 = vector.broadcast %cst_36 : f32 to vector<2x1x256xf32>
    %411 = arith.subf %410, %409 : vector<2x1x256xf32>
    %412 = vector.broadcast %48 : vector<2x16x1xf32> to vector<2x16x256xf32>
    %413 = vector.broadcast %409 : vector<2x1x256xf32> to vector<2x16x256xf32>
    %414 = arith.addf %412, %413 : vector<2x16x256xf32>
    %cst_37 = arith.constant 1.000000e+00 : f32
    %415 = vector.broadcast %cst_37 : f32 to vector<2x16x256xf32>
    %416 = arith.addf %414, %415 : vector<2x16x256xf32>
    %417 = vector.broadcast %50 : vector<2x16x1xf32> to vector<2x16x256xf32>
    %418 = vector.broadcast %411 : vector<2x1x256xf32> to vector<2x16x256xf32>
    %419 = arith.addf %417, %418 : vector<2x16x256xf32>
    %cst_38 = arith.constant 1.000000e+00 : f32
    %420 = vector.broadcast %cst_38 : f32 to vector<2x16x256xf32>
    %421 = arith.addf %419, %420 : vector<2x16x256xf32>
    %422 = arith.mulf %416, %0 : vector<2x16x256xf32>
    %423 = arith.mulf %421, %1 : vector<2x16x256xf32>
    %424 = arith.addf %422, %423 : vector<2x16x256xf32>
    %c0_39 = arith.constant 0 : index
    %c0_40 = arith.constant 0 : index
    %c0_41 = arith.constant 0 : index
    %425 = vector.load %arg7[%c0_39, %c0_40, %c0_41] : memref<2x16x256xf32, #tpu.memory_space<vmem>>, vector<2x16x256xf32>
    tpu.vector_store %arg7[%c0_39, %c0_40, %c0_41], %424 {strides = array<i32>} : memref<2x16x256xf32, #tpu.memory_space<vmem>>, vector<2x16x256xf32>,
    return
  }
  func.func @transform_0(%arg0: i32) -> (i32, i32) {
    %c0_i32 = arith.constant 0 : i32
    %c0_i32_0 = arith.constant 0 : i32
    %c0_i32_1 = arith.constant 0 : i32
    return %c0_i32, %c0_i32_0 : i32, i32
  }
  func.func @transform_1(%arg0: i32) -> (i32, i32) {
    %c0_i32 = arith.constant 0 : i32
    %c0_i32_0 = arith.constant 0 : i32
    %c0_i32_1 = arith.constant 0 : i32
    return %c0_i32, %c0_i32_0 : i32, i32
  }
  func.func @transform_2(%arg0: i32) -> i32 {
    %c0_i32 = arith.constant 0 : i32
    %c0_i32_0 = arith.constant 0 : i32
    return %c0_i32 : i32
  }
  func.func @transform_3(%arg0: i32) -> (i32, i32) {
    %c0_i32 = arith.constant 0 : i32
    %c0_i32_0 = arith.constant 0 : i32
    %c0_i32_1 = arith.constant 0 : i32
    return %c0_i32, %c0_i32_0 : i32, i32
  }
  func.func @transform_4(%arg0: i32) -> (i32, i32, i32) {
    %c0_i32 = arith.constant 0 : i32
    %c0_i32_0 = arith.constant 0 : i32
    %c0_i32_1 = arith.constant 0 : i32
    return %arg0, %c0_i32, %c0_i32_0 : i32, i32, i32
  }
  func.func @transform_5(%arg0: i32) -> (i32, i32, i32) {
    %c0_i32 = arith.constant 0 : i32
    %c0_i32_0 = arith.constant 0 : i32
    %c0_i32_1 = arith.constant 0 : i32
    return %arg0, %c0_i32, %c0_i32_0 : i32, i32, i32
  }
  func.func @transform_6(%arg0: i32) -> (i32, i32, i32) {
    %c0_i32 = arith.constant 0 : i32
    %c0_i32_0 = arith.constant 0 : i32
    %c0_i32_1 = arith.constant 0 : i32
    return %arg0, %c0_i32, %c0_i32_0 : i32, i32, i32
  }
}

</mosaic_0001>

<llo_original>
// kernel: tpu_custom_call.1
$region0: #{tpu_custom_call.1}
  #allocation0 [shape = 'u32[]', space=smem, size = 0x4, offset = 0x4, fixed_abs, tag = 'smem constant byte address 0x4 - core index']
  #allocation1 [shape = 'u32[144,128]{1,0:T(1,128)}', space=vmem, size = 0x12000, scoped, tag = 'internal scratch']
  %s0 = inlined_call_operand.hbm [shape: f32[8,128], index: 0, kind: input, shape index: {}]
  %s1 = inlined_call_operand.hbm [shape: f32[8,128], index: 1, kind: input, shape index: {}]
  %s2 = inlined_call_operand.vmem [shape: f32[2], index: 2, kind: input, shape index: {}]
  %s3 = inlined_call_operand.hbm [shape: f32[8,352], index: 3, kind: input, shape index: {}]
  %s4 = inlined_call_operand.hbm [shape: f32[2,16,256], index: 4, kind: input, shape index: {}]
  %s5 = inlined_call_operand.hbm [shape: f32[2,16,256], index: 5, kind: input, shape index: {}]
  %s6 = inlined_call_operand.hbm [shape: f32[2,16,256], index: 6, kind: output, shape index: {}]
  %s7 = sld [smem:[#allocation0]]
  $region58: #{tpu_custom_call.1} parent=0
    _
  %s9 = ssub.s32 1, %s7
  %s10 = scalar_select 0, %s9, %s7
  $region1: #{tpu_custom_call.1} parent=0
    #allocation2 [shape = 'u8[4096]{0}', space=vmem, size = 0x1000, scoped, tag = 'input window, operand 0, single buffered']
    #allocation3 [shape = 's32[1]{0}', space=sflag, size = 0x4, scoped, tag = 'scoped memory for tpu_custom_call.1']
    #allocation4 [shape = 's32[1]{0}', space=sflag, size = 0x4, scoped, tag = 'scoped memory for tpu_custom_call.1']
    #allocation5 [shape = 's32[1]{0}', space=sflag, size = 0x4, scoped, tag = 'scoped memory for tpu_custom_call.1']
    #allocation6 [shape = 'u8[4096]{0}', space=vmem, size = 0x1000, scoped, tag = 'input window, operand 1, single buffered']
    #allocation7 [shape = 's32[1]{0}', space=sflag, size = 0x4, scoped, tag = 'scoped memory for tpu_custom_call.1']
    #allocation8 [shape = 'u8[512]{0}', space=smem, size = 0x200, scoped, tag = 'input window, operand 2, single buffered']
    #allocation9 [shape = 'u8[12288]{0}', space=vmem, size = 0x3000, scoped, tag = 'input window, operand 3, single buffered']
    #allocation10 [shape = 'u8[32768]{0}', space=vmem, size = 0x8000, scoped, tag = 'input window, operand 4, single buffered']
    #allocation11 [shape = 's32[1]{0}', space=sflag, size = 0x4, scoped, tag = 'scoped memory for tpu_custom_call.1']
    #allocation12 [shape = 'u8[32768]{0}', space=vmem, size = 0x8000, scoped, tag = 'input window, operand 5, single buffered']
    #allocation13 [shape = 'u8[32768]{0}', space=vmem, size = 0x8000, scoped, tag = 'output window, operand 0, single buffered']
    %11 = vsyncpa [#allocation3], 0
    %12 = vsyncpa [#allocation7], 0
    %13 = vsyncpa [#allocation5], 0
    %14 = vsyncpa [#allocation11], 0
    %15 = vsyncpa [#allocation4], 0
    // Predicated region
    $region2: #{tpu_custom_call.1} parent=1 // pred_check
      _
    $region3: #{tpu_custom_call.1} parent=1 // pred_check_branch
      %17 = sbr.rel (0) target = $region5
    $region4: #{tpu_custom_call.1} parent=1 // pred_region
      %s19 = ssub.s32 128, 128
      %20 = vsyncadd [#allocation3], %s19
      %s22 = sshll.u32 [#allocation2], 4
      %s23 = int_to_ptr.vmem [resolvable:$true] %s22
      %25 = dma.hbm_to_vmem [thread:$0]  %s0, 128, %s23, [#allocation3]
    $region5: #{tpu_custom_call.1} parent=1 // pred_fallthru
      _
    // Predicated region
    $region6: #{tpu_custom_call.1} parent=1 // pred_check
      _
    $region7: #{tpu_custom_call.1} parent=1 // pred_check_branch
      %27 = sbr.rel (0) target = $region9
    $region8: #{tpu_custom_call.1} parent=1 // pred_region
      %s29 = ssub.s32 128, 128
      %30 = vsyncadd [#allocation7], %s29
      %s32 = sshll.u32 [#allocation6], 4
      %s33 = int_to_ptr.vmem [resolvable:$true] %s32
      %35 = dma.hbm_to_vmem [thread:$0]  %s1, 128, %s33, [#allocation7]
    $region9: #{tpu_custom_call.1} parent=1 // pred_fallthru
      _
    // Predicated region
    $region10: #{tpu_custom_call.1} parent=1 // pred_check
      _
    $region11: #{tpu_custom_call.1} parent=1 // pred_check_branch
      %37 = sbr.rel (0) target = $region13
    $region12: #{tpu_custom_call.1} parent=1 // pred_region
      %s39 = ssub.s32 16, 16
      %40 = vsyncadd [#allocation5], %s39
      %s42 = sshll.u32 %s2, 4
      %s43 = int_to_ptr.vmem [resolvable:$true] %s42
      %45 = dma.vmem_to_smem %s43, 16, [#allocation8], [#allocation5]
    $region13: #{tpu_custom_call.1} parent=1 // pred_fallthru
      _
    // Predicated region
    $region14: #{tpu_custom_call.1} parent=1 // pred_check
      _
    $region15: #{tpu_custom_call.1} parent=1 // pred_check_branch
      %47 = sbr.rel (0) target = $region17
    $region16: #{tpu_custom_call.1} parent=1 // pred_region
      %s49 = ssub.s32 384, 384
      %50 = vsyncadd [#allocation7], %s49
      %s52 = sshll.u32 [#allocation9], 4
      %s53 = int_to_ptr.vmem [resolvable:$true] %s52
      %55 = dma.hbm_to_vmem [thread:$0]  %s3, 384, %s53, [#allocation7]
    $region17: #{tpu_custom_call.1} parent=1 // pred_fallthru
      _
    // Predicated region
    $region18: #{tpu_custom_call.1} parent=1 // pred_check
      _
    $region19: #{tpu_custom_call.1} parent=1 // pred_check_branch
      %57 = sbr.rel (0) target = $region21
    $region20: #{tpu_custom_call.1} parent=1 // pred_region
      %s59 = ssub.s32 1024, 1024
      %60 = vsyncadd [#allocation11], %s59
      %s61 = sshll.u32 [#allocation10], 4
      %s62 = int_to_ptr.vmem [resolvable:$true] %s61
      %67 = dma.hbm_to_vmem [thread:$0]  %s4, 1024, %s62, [#allocation11], 256, 256, 16
    $region21: #{tpu_custom_call.1} parent=1 // pred_fallthru
      _
    // Predicated region
    $region22: #{tpu_custom_call.1} parent=1 // pred_check
      _
    $region23: #{tpu_custom_call.1} parent=1 // pred_check_branch
      %69 = sbr.rel (0) target = $region25
    $region24: #{tpu_custom_call.1} parent=1 // pred_region
      %s71 = ssub.s32 1024, 1024
      %72 = vsyncadd [#allocation11], %s71
      %s73 = sshll.u32 [#allocation12], 4
      %s74 = int_to_ptr.vmem [resolvable:$true] %s73
      %79 = dma.hbm_to_vmem [thread:$0]  %s5, 1024, %s74, [#allocation11], 256, 256, 16
    $region25: #{tpu_custom_call.1} parent=1 // pred_fallthru
      _
    // Predicated region
    $region26: #{tpu_custom_call.1} parent=1 // pred_check
      _
    $region27: #{tpu_custom_call.1} parent=1 // pred_check_branch
      %81 = sbr.rel (0) target = $region29
    $region28: #{tpu_custom_call.1} parent=1 // pred_region
      %82 = dma.done [#allocation3], 128
    $region29: #{tpu_custom_call.1} parent=1 // pred_fallthru
      _
    // Predicated region
    $region30: #{tpu_custom_call.1} parent=1 // pred_check
      _
    $region31: #{tpu_custom_call.1} parent=1 // pred_check_branch
      %84 = sbr.rel (0) target = $region33
    $region32: #{tpu_custom_call.1} parent=1 // pred_region
      %85 = dma.done [#allocation7], 128
    $region33: #{tpu_custom_call.1} parent=1 // pred_fallthru
      _
    // Predicated region
    $region34: #{tpu_custom_call.1} parent=1 // pred_check
      _
    $region35: #{tpu_custom_call.1} parent=1 // pred_check_branch
      %87 = sbr.rel (0) target = $region37
    $region36: #{tpu_custom_call.1} parent=1 // pred_region
      %88 = dma.done [#allocation5], 16
    $region37: #{tpu_custom_call.1} parent=1 // pred_fallthru
      _
    // Predicated region
    $region38: #{tpu_custom_call.1} parent=1 // pred_check
      _
    $region39: #{tpu_custom_call.1} parent=1 // pred_check_branch
      %90 = sbr.rel (0) target = $region41
    $region40: #{tpu_custom_call.1} parent=1 // pred_region
      %91 = dma.done [#allocation7], 384
    $region41: #{tpu_custom_call.1} parent=1 // pred_fallthru
      _
    // Predicated region
    $region42: #{tpu_custom_call.1} parent=1 // pred_check
      _
    $region43: #{tpu_custom_call.1} parent=1 // pred_check_branch
      %93 = sbr.rel (0) target = $region45
    $region44: #{tpu_custom_call.1} parent=1 // pred_region
      %94 = dma.done [#allocation11], 1024
    $region45: #{tpu_custom_call.1} parent=1 // pred_fallthru
      _
    // Predicated region
    $region46: #{tpu_custom_call.1} parent=1 // pred_check
      _
    $region47: #{tpu_custom_call.1} parent=1 // pred_check_branch
      %96 = sbr.rel (0) target = $region49
    $region48: #{tpu_custom_call.1} parent=1 // pred_region
      %97 = dma.done [#allocation11], 1024
    $region49: #{tpu_custom_call.1} parent=1 // pred_fallthru
      _
    %98 = sfence
    %v99 = vld [vmem:[#allocation10] sm:$0xff]
    %v100 = vld [vmem:[#allocation10 + $0x8] sm:$0xff]
    %v101 = vld [vmem:[#allocation10 + $0x10] sm:$0xff]
    %v102 = vld [vmem:[#allocation10 + $0x18] sm:$0xff]
    %v103 = vld [vmem:[#allocation10 + $0x20] sm:$0xff]
    %v104 = vld [vmem:[#allocation10 + $0x28] sm:$0xff]
    %v105 = vld [vmem:[#allocation10 + $0x30] sm:$0xff]
    %v106 = vld [vmem:[#allocation10 + $0x38] sm:$0xff]
    %v107 = vld [vmem:[#allocation12] sm:$0xff]
    %v108 = vld [vmem:[#allocation12 + $0x8] sm:$0xff]
    %v109 = vld [vmem:[#allocation12 + $0x10] sm:$0xff]
    %v110 = vld [vmem:[#allocation12 + $0x18] sm:$0xff]
    %v111 = vld [vmem:[#allocation12 + $0x20] sm:$0xff]
    %v112 = vld [vmem:[#allocation12 + $0x28] sm:$0xff]
    %v113 = vld [vmem:[#allocation12 + $0x30] sm:$0xff]
    %v114 = vld [vmem:[#allocation12 + $0x38] sm:$0xff]
    %v115 = vadd.f32 %v99, %v100
    %116 = vadd.xlane.f32.xlu0 %v115
    %v117 = vpop.xlane.xlu0 %116
    %v118 = vadd.f32 %v101, %v102
    %119 = vadd.xlane.f32.xlu0 %v118
    %v120 = vpop.xlane.xlu0 %119
    %v121 = vadd.f32 %v103, %v104
    %122 = vadd.xlane.f32.xlu0 %v121
    %v123 = vpop.xlane.xlu0 %122
    %v124 = vadd.f32 %v105, %v106
    %125 = vadd.xlane.f32.xlu0 %v124
    %v126 = vpop.xlane.xlu0 %125
    %v127 = vrcp.pop 256.0
    %v128 = vmul.f32 %v117, %v127
    %v129 = vmul.f32 %v120, %v127
    %v130 = vmul.f32 %v123, %v127
    %v131 = vmul.f32 %v126, %v127
    %v132 = vmax.f32 %v99, %v100
    %133 = vmax.xlane.f32.xlu0 %v132
    %v134 = vpop.xlane.xlu0 %133
    %v135 = vmax.f32 %v101, %v102
    %136 = vmax.xlane.f32.xlu0 %v135
    %v137 = vpop.xlane.xlu0 %136
    %v138 = vmax.f32 %v103, %v104
    %139 = vmax.xlane.f32.xlu0 %v138
    %v140 = vpop.xlane.xlu0 %139
    %v141 = vmax.f32 %v105, %v106
    %142 = vmax.xlane.f32.xlu0 %v141
    %v143 = vpop.xlane.xlu0 %142
    %v144 = vadd.f32 %v107, %v108
    %145 = vadd.xlane.f32.xlu0 %v144
    %v146 = vpop.xlane.xlu0 %145
    %v147 = vadd.f32 %v109, %v110
    %148 = vadd.xlane.f32.xlu0 %v147
    %v149 = vpop.xlane.xlu0 %148
    %v150 = vadd.f32 %v111, %v112
    %151 = vadd.xlane.f32.xlu0 %v150
    %v152 = vpop.xlane.xlu0 %151
    %v153 = vadd.f32 %v113, %v114
    %154 = vadd.xlane.f32.xlu0 %v153
    %v155 = vpop.xlane.xlu0 %154
    %v156 = vmul.f32 %v146, %v127
    %v157 = vmul.f32 %v149, %v127
    %v158 = vmul.f32 %v152, %v127
    %v159 = vmul.f32 %v155, %v127
    %v160 = vmax.f32 %v107, %v108
    %161 = vmax.xlane.f32.xlu0 %v160
    %v162 = vpop.xlane.xlu0 %161
    %v163 = vmax.f32 %v109, %v110
    %164 = vmax.xlane.f32.xlu0 %v163
    %v165 = vpop.xlane.xlu0 %164
    %v166 = vmax.f32 %v111, %v112
    %167 = vmax.xlane.f32.xlu0 %v166
    %v168 = vpop.xlane.xlu0 %167
    %v169 = vmax.f32 %v113, %v114
    %170 = vmax.xlane.f32.xlu0 %v169
    %v171 = vpop.xlane.xlu0 %170
    %vm172 = vcmask 7168
    %v173 = vsel %vm172, %v128, %v134
    %v174 = vsel %vm172, %v129, %v137
    %v175 = vsel %vm172, %v130, %v140
    %v176 = vsel %vm172, %v131, %v143
    %vm177 = vcmask 15360
    %v178 = vsel %vm177, %v173, %v156
    %v179 = vsel %vm177, %v174, %v157
    %v180 = vsel %vm177, %v175, %v158
    %v181 = vsel %vm177, %v176, %v159
    %vm182 = vcmask 23552
    %v183 = vsel %vm182, %v178, %v162
    %v184 = vsel %vm182, %v179, %v165
    %v185 = vsel %vm182, %v180, %v168
    %v186 = vsel %vm182, %v181, %v171
    %vm191 = vcmask 1040384
    %v192 = vrot.slane %v183, 7
    %v193 = vrot.slane %v184, 7
    %v194 = vsel %vm191, %v192, %v193
    %v195 = vrot.slane %v185, 7
    %v196 = vrot.slane %v186, 7
    %v197 = vsel %vm191, %v195, %v196
    %v204 = vsel %vm191, 0.0, %v192
    %v205 = vsel %vm191, 0.0, %v195
    %v206 = vsel %vm191, %v193, 0.0
    %v207 = vsel %vm191, %v196, 0.0
    %v208 = vld [vmem:[#allocation2] sm:$0xff]
    %v209 = vlaneseq
    %v210 = vshrl.u32 %v209, 7
    %v211 = vsub.s32 0, %v210
    %v212 = vrot.slane %v208, %v211
    %v213 = vmul.f32 %v212, %v204
    %v214 = vmul.f32 %v212, %v194
    %v215 = vmul.f32 %v212, %v205
    %v216 = vmul.f32 %v212, %v197
    %v217 = vadd.f32 %v213, 0.0
    %v218 = vadd.f32 %v214, 0.0
    %v219 = vadd.f32 %v215, 0.0
    %v220 = vadd.f32 %v216, 0.0
    %v221 = vlaneseq
    %v222 = vshrl.u32 %v221, 7
    %v223 = vsub.s32 1, %v222
    %v224 = vrot.slane %v208, %v223
    %v225 = vmul.f32 %v224, %v204
    %v226 = vmul.f32 %v224, %v194
    %v227 = vmul.f32 %v224, %v206
    %v228 = vmul.f32 %v224, %v205
    %v229 = vmul.f32 %v224, %v197
    %v230 = vmul.f32 %v224, %v207
    %vm237 = vcmask 1046528
    %v238 = vrot.slane %v225, 1
    %v239 = vrot.slane %v226, 1
    %v240 = vsel %vm237, %v238, %v239
    %v241 = vrot.slane %v227, 1
    %v242 = vsel %vm237, %v239, %v241
    %v243 = vrot.slane %v228, 1
    %v244 = vrot.slane %v229, 1
    %v245 = vsel %vm237, %v243, %v244
    %v246 = vrot.slane %v230, 1
    %v247 = vsel %vm237, %v244, %v246
    %v252 = vadd.f32 %v217, %v240
    %v253 = vadd.f32 %v218, %v242
    %v254 = vadd.f32 %v219, %v245
    %v255 = vadd.f32 %v220, %v247
    %v256 = vlaneseq
    %v257 = vshrl.u32 %v256, 7
    %v258 = vsub.s32 2, %v257
    %v259 = vrot.slane %v208, %v258
    %v260 = vmul.f32 %v259, %v204
    %v261 = vmul.f32 %v259, %v194
    %v262 = vmul.f32 %v259, %v206
    %v263 = vmul.f32 %v259, %v205
    %v264 = vmul.f32 %v259, %v197
    %v265 = vmul.f32 %v259, %v207
    %vm272 = vcmask 1045504
    %v273 = vrot.slane %v260, 2
    %v274 = vrot.slane %v261, 2
    %v275 = vsel %vm272, %v273, %v274
    %v276 = vrot.slane %v262, 2
    %v277 = vsel %vm272, %v274, %v276
    %v278 = vrot.slane %v263, 2
    %v279 = vrot.slane %v264, 2
    %v280 = vsel %vm272, %v278, %v279
    %v281 = vrot.slane %v265, 2
    %v282 = vsel %vm272, %v279, %v281
    %v287 = vadd.f32 %v252, %v275
    %v288 = vadd.f32 %v253, %v277
    %v289 = vadd.f32 %v254, %v280
    %v290 = vadd.f32 %v255, %v282
    %vm291 = vcmask 31744
    %v292 = vsel %vm291, %v287, 0.0
    %293 = vadd.xlane.f32.xlu0 %v292
    %v294 = vpop.xlane.xlu0 %293
    %v295 = vsel %vm291, %v288, 0.0
    %296 = vadd.xlane.f32.xlu0 %v295
    %v297 = vpop.xlane.xlu0 %296
    %v298 = vsel %vm291, %v289, 0.0
    %299 = vadd.xlane.f32.xlu0 %v298
    %v300 = vpop.xlane.xlu0 %299
    %v301 = vsel %vm291, %v290, 0.0
    %302 = vadd.xlane.f32.xlu0 %v301
    %v303 = vpop.xlane.xlu0 %302
    %s304 = sld [smem:[#allocation8]]
    %v305 = vstv %s304
    %v306 = vadd.f32 %v294, %v305
    %v307 = vadd.f32 %v297, %v305
    %v308 = vadd.f32 %v300, %v305
    %v309 = vadd.f32 %v303, %v305
    %v310 = vsub.f32 0.0, %v306
    %v311 = vsub.f32 0.0, %v307
    %v312 = vsub.f32 0.0, %v308
    %v313 = vsub.f32 0.0, %v309
    %v314 = vmul.f32 %v310, 1.442695
    %v315 = vpow.pop %v314
    %v316 = vmul.f32 %v311, 1.442695
    %v317 = vpow.pop %v316
    %v318 = vmul.f32 %v312, 1.442695
    %v319 = vpow.pop %v318
    %v320 = vmul.f32 %v313, 1.442695
    %v321 = vpow.pop %v320
    %v322 = vadd.f32 %v315, 1.0
    %v323 = vadd.f32 %v317, 1.0
    %v324 = vadd.f32 %v319, 1.0
    %v325 = vadd.f32 %v321, 1.0
    %v326 = vrcp.pop %v322
    %v327 = vmul.f32 1.0, %v326
    %v328 = vrcp.pop %v323
    %v329 = vmul.f32 1.0, %v328
    %v330 = vrcp.pop %v324
    %v331 = vmul.f32 1.0, %v330
    %v332 = vrcp.pop %v325
    %v333 = vmul.f32 1.0, %v332
    %v334 = vsub.f32 1.0, %v327
    %v335 = vsub.f32 1.0, %v329
    %v336 = vsub.f32 1.0, %v331
    %v337 = vsub.f32 1.0, %v333
    %v338 = vadd.f32 %v99, %v101
    %v339 = vrot.slane %v338, 4
    %v340 = vadd.f32 %v338, %v339
    %v341 = vrot.slane %v340, 2
    %v342 = vadd.f32 %v340, %v341
    %v343 = vrot.slane %v342, 1
    %v344 = vadd.f32 %v342, %v343
    %v345 = vadd.f32 %v100, %v102
    %v346 = vrot.slane %v345, 4
    %v347 = vadd.f32 %v345, %v346
    %v348 = vrot.slane %v347, 2
    %v349 = vadd.f32 %v347, %v348
    %v350 = vrot.slane %v349, 1
    %v351 = vadd.f32 %v349, %v350
    %v352 = vadd.f32 %v103, %v105
    %v353 = vrot.slane %v352, 4
    %v354 = vadd.f32 %v352, %v353
    %v355 = vrot.slane %v354, 2
    %v356 = vadd.f32 %v354, %v355
    %v357 = vrot.slane %v356, 1
    %v358 = vadd.f32 %v356, %v357
    %v359 = vadd.f32 %v104, %v106
    %v360 = vrot.slane %v359, 4
    %v361 = vadd.f32 %v359, %v360
    %v362 = vrot.slane %v361, 2
    %v363 = vadd.f32 %v361, %v362
    %v364 = vrot.slane %v363, 1
    %v365 = vadd.f32 %v363, %v364
    %v366 = vrcp.pop 16.0
    %v367 = vmul.f32 %v344, %v366
    %v368 = vmul.f32 %v351, %v366
    %v369 = vmul.f32 %v358, %v366
    %v370 = vmul.f32 %v365, %v366
    %v371 = vmax.f32 %v99, %v101
    %v372 = vrot.slane %v371, 4
    %v373 = vmax.f32 %v371, %v372
    %v374 = vrot.slane %v373, 2
    %v375 = vmax.f32 %v373, %v374
    %v376 = vrot.slane %v375, 1
    %v377 = vmax.f32 %v375, %v376
    %v378 = vmax.f32 %v100, %v102
    %v379 = vrot.slane %v378, 4
    %v380 = vmax.f32 %v378, %v379
    %v381 = vrot.slane %v380, 2
    %v382 = vmax.f32 %v380, %v381
    %v383 = vrot.slane %v382, 1
    %v384 = vmax.f32 %v382, %v383
    %v385 = vmax.f32 %v103, %v105
    %v386 = vrot.slane %v385, 4
    %v387 = vmax.f32 %v385, %v386
    %v388 = vrot.slane %v387, 2
    %v389 = vmax.f32 %v387, %v388
    %v390 = vrot.slane %v389, 1
    %v391 = vmax.f32 %v389, %v390
    %v392 = vmax.f32 %v104, %v106
    %v393 = vrot.slane %v392, 4
    %v394 = vmax.f32 %v392, %v393
    %v395 = vrot.slane %v394, 2
    %v396 = vmax.f32 %v394, %v395
    %v397 = vrot.slane %v396, 1
    %v398 = vmax.f32 %v396, %v397
    %v399 = vadd.f32 %v107, %v109
    %v400 = vrot.slane %v399, 4
    %v401 = vadd.f32 %v399, %v400
    %v402 = vrot.slane %v401, 2
    %v403 = vadd.f32 %v401, %v402
    %v404 = vrot.slane %v403, 1
    %v405 = vadd.f32 %v403, %v404
    %v406 = vadd.f32 %v108, %v110
    %v407 = vrot.slane %v406, 4
    %v408 = vadd.f32 %v406, %v407
    %v409 = vrot.slane %v408, 2
    %v410 = vadd.f32 %v408, %v409
    %v411 = vrot.slane %v410, 1
    %v412 = vadd.f32 %v410, %v411
    %v413 = vadd.f32 %v111, %v113
    %v414 = vrot.slane %v413, 4
    %v415 = vadd.f32 %v413, %v414
    %v416 = vrot.slane %v415, 2
    %v417 = vadd.f32 %v415, %v416
    %v418 = vrot.slane %v417, 1
    %v419 = vadd.f32 %v417, %v418
    %v420 = vadd.f32 %v112, %v114
    %v421 = vrot.slane %v420, 4
    %v422 = vadd.f32 %v420, %v421
    %v423 = vrot.slane %v422, 2
    %v424 = vadd.f32 %v422, %v423
    %v425 = vrot.slane %v424, 1
    %v426 = vadd.f32 %v424, %v425
    %v427 = vmul.f32 %v405, %v366
    %v428 = vmul.f32 %v412, %v366
    %v429 = vmul.f32 %v419, %v366
    %v430 = vmul.f32 %v426, %v366
    %v431 = vmax.f32 %v107, %v109
    %v432 = vrot.slane %v431, 4
    %v433 = vmax.f32 %v431, %v432
    %v434 = vrot.slane %v433, 2
    %v435 = vmax.f32 %v433, %v434
    %v436 = vrot.slane %v435, 1
    %v437 = vmax.f32 %v435, %v436
    %v438 = vmax.f32 %v108, %v110
    %v439 = vrot.slane %v438, 4
    %v440 = vmax.f32 %v438, %v439
    %v441 = vrot.slane %v440, 2
    %v442 = vmax.f32 %v440, %v441
    %v443 = vrot.slane %v442, 1
    %v444 = vmax.f32 %v442, %v443
    %v445 = vmax.f32 %v111, %v113
    %v446 = vrot.slane %v445, 4
    %v447 = vmax.f32 %v445, %v446
    %v448 = vrot.slane %v447, 2
    %v449 = vmax.f32 %v447, %v448
    %v450 = vrot.slane %v449, 1
    %v451 = vmax.f32 %v449, %v450
    %v452 = vmax.f32 %v112, %v114
    %v453 = vrot.slane %v452, 4
    %v454 = vmax.f32 %v452, %v453
    %v455 = vrot.slane %v454, 2
    %v456 = vmax.f32 %v454, %v455
    %v457 = vrot.slane %v456, 1
    %v458 = vmax.f32 %v456, %v457
    %v459 = vsel %vm191, %v367, %v377
    %v460 = vsel %vm191, %v368, %v384
    %v461 = vsel %vm191, %v369, %v391
    %v462 = vsel %vm191, %v370, %v398
    %vm463 = vcmask 1041408
    %v464 = vsel %vm463, %v459, %v427
    %v465 = vsel %vm463, %v460, %v428
    %v466 = vsel %vm463, %v461, %v429
    %v467 = vsel %vm463, %v462, %v430
    %vm468 = vcmask 1042432
    %v469 = vsel %vm468, %v464, %v437
    %v470 = vsel %vm468, %v465, %v444
    %v471 = vsel %vm468, %v466, %v451
    %v472 = vsel %vm468, %v467, %v458
    %477 = vrot.lane.b32.xlu0 %v469, 51
    %v478 = vpop.permute.xlu0 %477
    %479 = vrot.lane.b32.xlu0 %v470, 51
    %v480 = vpop.permute.xlu0 %479
    %481 = vrot.lane.b32.xlu0 %v471, 51
    %v482 = vpop.permute.xlu0 %481
    %483 = vrot.lane.b32.xlu0 %v472, 51
    %v484 = vpop.permute.xlu0 %483
    %vm485 = vcmask 416768
    %v486 = vsel %vm485, %v478, %v480
    %v487 = vsel %vm485, %v482, %v484
    %v494 = vsel %vm485, 0.0, %v478
    %v495 = vsel %vm485, 0.0, %v482
    %v496 = vsel %vm485, %v480, 0.0
    %v497 = vsel %vm485, %v484, 0.0
    %v498 = vld [vmem:[#allocation6] sm:$0xff]
    %v499 = vld [vmem:[#allocation9] sm:$0xff]
    %v500 = vld [vmem:[#allocation9 + $0x8] sm:$0xff]
    %v501 = vld [vmem:[#allocation9 + $0x10] sm:$0xff]
    %v502 = vlaneseq
    %v503 = vshrl.u32 %v502, 7
    %v504 = vsub.s32 0, %v503
    %v505 = vrot.slane %v499, %v504
    %v506 = vlaneseq
    %v507 = vshrl.u32 %v506, 7
    %v508 = vsub.s32 0, %v507
    %v509 = vrot.slane %v500, %v508
    %v510 = vlaneseq
    %v511 = vshrl.u32 %v510, 7
    %v512 = vsub.s32 0, %v511
    %v513 = vrot.slane %v501, %v512
    %v514 = vmul.f32 %v494, %v505
    %v515 = vmul.f32 %v486, %v509
    %v516 = vmul.f32 %v496, %v513
    %v517 = vmul.f32 %v495, %v505
    %v518 = vmul.f32 %v487, %v509
    %v519 = vmul.f32 %v497, %v513
    %v520 = vlaneseq
    %v521 = vshrl.u32 %v520, 7
    %v522 = vsub.s32 1, %v521
    %v523 = vrot.slane %v499, %v522
    %v524 = vlaneseq
    %v525 = vshrl.u32 %v524, 7
    %v526 = vsub.s32 1, %v525
    %v527 = vrot.slane %v500, %v526
    %v528 = vlaneseq
    %v529 = vshrl.u32 %v528, 7
    %v530 = vsub.s32 1, %v529
    %v531 = vrot.slane %v501, %v530
    %535 = vrot.lane.b32.xlu0 %v523, 1
    %v536 = vpop.permute.xlu0 %535
    %537 = vrot.lane.b32.xlu0 %v527, 1
    %v538 = vpop.permute.xlu0 %537
    %539 = vrot.lane.b32.xlu0 %v531, 1
    %v540 = vpop.permute.xlu0 %539
    %v541 = vsel %vm172, %v536, %v538
    %v542 = vsel %vm172, %v538, %v540
    %v546 = vmul.f32 %v494, %v536
    %v547 = vmul.f32 %v486, %v541
    %v548 = vmul.f32 %v496, %v542
    %v549 = vmul.f32 %v495, %v536
    %v550 = vmul.f32 %v487, %v541
    %v551 = vmul.f32 %v497, %v542
    %v552 = vlaneseq
    %v553 = vshrl.u32 %v552, 7
    %v554 = vsub.s32 2, %v553
    %v555 = vrot.slane %v499, %v554
    %v556 = vlaneseq
    %v557 = vshrl.u32 %v556, 7
    %v558 = vsub.s32 2, %v557
    %v559 = vrot.slane %v500, %v558
    %v560 = vlaneseq
    %v561 = vshrl.u32 %v560, 7
    %v562 = vsub.s32 2, %v561
    %v563 = vrot.slane %v501, %v562
    %567 = vrot.lane.b32.xlu0 %v555, 2
    %v568 = vpop.permute.xlu0 %567
    %569 = vrot.lane.b32.xlu0 %v559, 2
    %v570 = vpop.permute.xlu0 %569
    %571 = vrot.lane.b32.xlu0 %v563, 2
    %v572 = vpop.permute.xlu0 %571
    %v573 = vsel %vm177, %v568, %v570
    %v574 = vsel %vm177, %v570, %v572
    %v578 = vmul.f32 %v494, %v568
    %v579 = vmul.f32 %v486, %v573
    %v580 = vmul.f32 %v496, %v574
    %v581 = vmul.f32 %v495, %v568
    %v582 = vmul.f32 %v487, %v573
    %v583 = vmul.f32 %v497, %v574
    %v584 = vlaneseq
    %v585 = vshrl.u32 %v584, 7
    %v586 = vsub.s32 3, %v585
    %v587 = vrot.slane %v499, %v586
    %v588 = vlaneseq
    %v589 = vshrl.u32 %v588, 7
    %v590 = vsub.s32 3, %v589
    %v591 = vrot.slane %v500, %v590
    %v592 = vlaneseq
    %v593 = vshrl.u32 %v592, 7
    %v594 = vsub.s32 3, %v593
    %v595 = vrot.slane %v501, %v594
    %599 = vrot.lane.b32.xlu0 %v587, 3
    %v600 = vpop.permute.xlu0 %599
    %601 = vrot.lane.b32.xlu0 %v591, 3
    %v602 = vpop.permute.xlu0 %601
    %603 = vrot.lane.b32.xlu0 %v595, 3
    %v604 = vpop.permute.xlu0 %603
    %v605 = vsel %vm182, %v600, %v602
    %v606 = vsel %vm182, %v602, %v604
    %v610 = vmul.f32 %v494, %v600
    %v611 = vmul.f32 %v486, %v605
    %v612 = vmul.f32 %v496, %v606
    %v613 = vmul.f32 %v495, %v600
    %v614 = vmul.f32 %v487, %v605
    %v615 = vmul.f32 %v497, %v606
    %v616 = vlaneseq
    %v617 = vshrl.u32 %v616, 7
    %v618 = vsub.s32 4, %v617
    %v619 = vrot.slane %v499, %v618
    %v620 = vlaneseq
    %v621 = vshrl.u32 %v620, 7
    %v622 = vsub.s32 4, %v621
    %v623 = vrot.slane %v500, %v622
    %v624 = vlaneseq
    %v625 = vshrl.u32 %v624, 7
    %v626 = vsub.s32 4, %v625
    %v627 = vrot.slane %v501, %v626
    %631 = vrot.lane.b32.xlu0 %v619, 4
    %v632 = vpop.permute.xlu0 %631
    %633 = vrot.lane.b32.xlu0 %v623, 4
    %v634 = vpop.permute.xlu0 %633
    %635 = vrot.lane.b32.xlu0 %v627, 4
    %v636 = vpop.permute.xlu0 %635
    %v637 = vsel %vm291, %v632, %v634
    %v638 = vsel %vm291, %v634, %v636
    %v642 = vmul.f32 %v494, %v632
    %v643 = vmul.f32 %v486, %v637
    %v644 = vmul.f32 %v496, %v638
    %v645 = vmul.f32 %v495, %v632
    %v646 = vmul.f32 %v487, %v637
    %v647 = vmul.f32 %v497, %v638
    %v648 = vlaneseq
    %v649 = vshrl.u32 %v648, 7
    %v650 = vsub.s32 5, %v649
    %v651 = vrot.slane %v499, %v650
    %v652 = vlaneseq
    %v653 = vshrl.u32 %v652, 7
    %v654 = vsub.s32 5, %v653
    %v655 = vrot.slane %v500, %v654
    %v656 = vlaneseq
    %v657 = vshrl.u32 %v656, 7
    %v658 = vsub.s32 5, %v657
    %v659 = vrot.slane %v501, %v658
    %663 = vrot.lane.b32.xlu0 %v651, 5
    %v664 = vpop.permute.xlu0 %663
    %665 = vrot.lane.b32.xlu0 %v655, 5
    %v666 = vpop.permute.xlu0 %665
    %667 = vrot.lane.b32.xlu0 %v659, 5
    %v668 = vpop.permute.xlu0 %667
    %vm669 = vcmask 39936
    %v670 = vsel %vm669, %v664, %v666
    %v671 = vsel %vm669, %v666, %v668
    %v675 = vmul.f32 %v494, %v664
    %v676 = vmul.f32 %v486, %v670
    %v677 = vmul.f32 %v496, %v671
    %v678 = vmul.f32 %v495, %v664
    %v679 = vmul.f32 %v487, %v670
    %v680 = vmul.f32 %v497, %v671
    %v681 = vlaneseq
    %v682 = vshrl.u32 %v681, 7
    %v683 = vsub.s32 6, %v682
    %v684 = vrot.slane %v499, %v683
    %v685 = vlaneseq
    %v686 = vshrl.u32 %v685, 7
    %v687 = vsub.s32 6, %v686
    %v688 = vrot.slane %v500, %v687
    %v689 = vlaneseq
    %v690 = vshrl.u32 %v689, 7
    %v691 = vsub.s32 6, %v690
    %v692 = vrot.slane %v501, %v691
    %696 = vrot.lane.b32.xlu0 %v684, 6
    %v697 = vpop.permute.xlu0 %696
    %698 = vrot.lane.b32.xlu0 %v688, 6
    %v699 = vpop.permute.xlu0 %698
    %700 = vrot.lane.b32.xlu0 %v692, 6
    %v701 = vpop.permute.xlu0 %700
    %vm702 = vcmask 48128
    %v703 = vsel %vm702, %v697, %v699
    %v704 = vsel %vm702, %v699, %v701
    %v708 = vmul.f32 %v494, %v697
    %v709 = vmul.f32 %v486, %v703
    %v710 = vmul.f32 %v496, %v704
    %v711 = vmul.f32 %v495, %v697
    %v712 = vmul.f32 %v487, %v703
    %v713 = vmul.f32 %v497, %v704
    %715 = vset.pattern.permute.xlu0 0
    %716 = vperm.xlu0 %715, %v498
    %v717 = vpop.permute.xlu0 %716
    %v719 = vmul.f32 %v717, %v514
    %v720 = vmul.f32 %v717, %v515
    %v721 = vmul.f32 %v717, %v517
    %v722 = vmul.f32 %v717, %v518
    %v723 = vadd.f32 %v719, 0.0
    %v724 = vadd.f32 %v720, 0.0
    %v725 = vadd.f32 %v721, 0.0
    %v726 = vadd.f32 %v722, 0.0
    %727 = vset.pattern.permute.xlu0 1
    %728 = vperm.xlu0 %727, %v498
    %v729 = vpop.permute.xlu0 %728
    %v731 = vmul.f32 %v729, %v546
    %v732 = vmul.f32 %v729, %v547
    %v733 = vmul.f32 %v729, %v548
    %v734 = vmul.f32 %v729, %v549
    %v735 = vmul.f32 %v729, %v550
    %v736 = vmul.f32 %v729, %v551
    %743 = vrot.lane.b32.xlu0 %v731, 127
    %v744 = vpop.permute.xlu0 %743
    %745 = vrot.lane.b32.xlu0 %v732, 127
    %v746 = vpop.permute.xlu0 %745
    %747 = vrot.lane.b32.xlu0 %v733, 127
    %v748 = vpop.permute.xlu0 %747
    %749 = vrot.lane.b32.xlu0 %v734, 127
    %v750 = vpop.permute.xlu0 %749
    %751 = vrot.lane.b32.xlu0 %v735, 127
    %v752 = vpop.permute.xlu0 %751
    %753 = vrot.lane.b32.xlu0 %v736, 127
    %v754 = vpop.permute.xlu0 %753
    %vm755 = vcmask 1039360
    %v756 = vsel %vm755, %v744, %v746
    %v757 = vsel %vm755, %v746, %v748
    %v758 = vsel %vm755, %v750, %v752
    %v759 = vsel %vm755, %v752, %v754
    %v764 = vadd.f32 %v723, %v756
    %v765 = vadd.f32 %v724, %v757
    %v766 = vadd.f32 %v725, %v758
    %v767 = vadd.f32 %v726, %v759
    %768 = vset.pattern.permute.xlu0 2
    %769 = vperm.xlu0 %768, %v498
    %v770 = vpop.permute.xlu0 %769
    %v772 = vmul.f32 %v770, %v578
    %v773 = vmul.f32 %v770, %v579
    %v774 = vmul.f32 %v770, %v580
    %v775 = vmul.f32 %v770, %v581
    %v776 = vmul.f32 %v770, %v582
    %v777 = vmul.f32 %v770, %v583
    %784 = vrot.lane.b32.xlu0 %v772, 126
    %v785 = vpop.permute.xlu0 %784
    %786 = vrot.lane.b32.xlu0 %v773, 126
    %v787 = vpop.permute.xlu0 %786
    %788 = vrot.lane.b32.xlu0 %v774, 126
    %v789 = vpop.permute.xlu0 %788
    %790 = vrot.lane.b32.xlu0 %v775, 126
    %v791 = vpop.permute.xlu0 %790
    %792 = vrot.lane.b32.xlu0 %v776, 126
    %v793 = vpop.permute.xlu0 %792
    %794 = vrot.lane.b32.xlu0 %v777, 126
    %v795 = vpop.permute.xlu0 %794
    %vm796 = vcmask 1031168
    %v797 = vsel %vm796, %v785, %v787
    %v798 = vsel %vm796, %v787, %v789
    %v799 = vsel %vm796, %v791, %v793
    %v800 = vsel %vm796, %v793, %v795
    %v805 = vadd.f32 %v764, %v797
    %v806 = vadd.f32 %v765, %v798
    %v807 = vadd.f32 %v766, %v799
    %v808 = vadd.f32 %v767, %v800
    %809 = vset.pattern.permute.xlu0 3
    %810 = vperm.xlu0 %809, %v498
    %v811 = vpop.permute.xlu0 %810
    %v813 = vmul.f32 %v811, %v610
    %v814 = vmul.f32 %v811, %v611
    %v815 = vmul.f32 %v811, %v612
    %v816 = vmul.f32 %v811, %v613
    %v817 = vmul.f32 %v811, %v614
    %v818 = vmul.f32 %v811, %v615
    %825 = vrot.lane.b32.xlu0 %v813, 125
    %v826 = vpop.permute.xlu0 %825
    %827 = vrot.lane.b32.xlu0 %v814, 125
    %v828 = vpop.permute.xlu0 %827
    %829 = vrot.lane.b32.xlu0 %v815, 125
    %v830 = vpop.permute.xlu0 %829
    %831 = vrot.lane.b32.xlu0 %v816, 125
    %v832 = vpop.permute.xlu0 %831
    %833 = vrot.lane.b32.xlu0 %v817, 125
    %v834 = vpop.permute.xlu0 %833
    %835 = vrot.lane.b32.xlu0 %v818, 125
    %v836 = vpop.permute.xlu0 %835
    %vm837 = vcmask 1022976
    %v838 = vsel %vm837, %v826, %v828
    %v839 = vsel %vm837, %v828, %v830
    %v840 = vsel %vm837, %v832, %v834
    %v841 = vsel %vm837, %v834, %v836
    %v846 = vadd.f32 %v805, %v838
    %v847 = vadd.f32 %v806, %v839
    %v848 = vadd.f32 %v807, %v840
    %v849 = vadd.f32 %v808, %v841
    %850 = vset.pattern.permute.xlu0 4
    %851 = vperm.xlu0 %850, %v498
    %v852 = vpop.permute.xlu0 %851
    %v854 = vmul.f32 %v852, %v642
    %v855 = vmul.f32 %v852, %v643
    %v856 = vmul.f32 %v852, %v644
    %v857 = vmul.f32 %v852, %v645
    %v858 = vmul.f32 %v852, %v646
    %v859 = vmul.f32 %v852, %v647
    %866 = vrot.lane.b32.xlu0 %v854, 124
    %v867 = vpop.permute.xlu0 %866
    %868 = vrot.lane.b32.xlu0 %v855, 124
    %v869 = vpop.permute.xlu0 %868
    %870 = vrot.lane.b32.xlu0 %v856, 124
    %v871 = vpop.permute.xlu0 %870
    %872 = vrot.lane.b32.xlu0 %v857, 124
    %v873 = vpop.permute.xlu0 %872
    %874 = vrot.lane.b32.xlu0 %v858, 124
    %v875 = vpop.permute.xlu0 %874
    %876 = vrot.lane.b32.xlu0 %v859, 124
    %v877 = vpop.permute.xlu0 %876
    %vm878 = vcmask 1014784
    %v879 = vsel %vm878, %v867, %v869
    %v880 = vsel %vm878, %v869, %v871
    %v881 = vsel %vm878, %v873, %v875
    %v882 = vsel %vm878, %v875, %v877
    %v887 = vadd.f32 %v846, %v879
    %v888 = vadd.f32 %v847, %v880
    %v889 = vadd.f32 %v848, %v881
    %v890 = vadd.f32 %v849, %v882
    %891 = vset.pattern.permute.xlu0 5
    %892 = vperm.xlu0 %891, %v498
    %v893 = vpop.permute.xlu0 %892
    %v895 = vmul.f32 %v893, %v675
    %v896 = vmul.f32 %v893, %v676
    %v897 = vmul.f32 %v893, %v677
    %v898 = vmul.f32 %v893, %v678
    %v899 = vmul.f32 %v893, %v679
    %v900 = vmul.f32 %v893, %v680
    %907 = vrot.lane.b32.xlu0 %v895, 123
    %v908 = vpop.permute.xlu0 %907
    %909 = vrot.lane.b32.xlu0 %v896, 123
    %v910 = vpop.permute.xlu0 %909
    %911 = vrot.lane.b32.xlu0 %v897, 123
    %v912 = vpop.permute.xlu0 %911
    %913 = vrot.lane.b32.xlu0 %v898, 123
    %v914 = vpop.permute.xlu0 %913
    %915 = vrot.lane.b32.xlu0 %v899, 123
    %v916 = vpop.permute.xlu0 %915
    %917 = vrot.lane.b32.xlu0 %v900, 123
    %v918 = vpop.permute.xlu0 %917
    %vm919 = vcmask 1006592
    %v920 = vsel %vm919, %v908, %v910
    %v921 = vsel %vm919, %v910, %v912
    %v922 = vsel %vm919, %v914, %v916
    %v923 = vsel %vm919, %v916, %v918
    %v928 = vadd.f32 %v887, %v920
    %v929 = vadd.f32 %v888, %v921
    %v930 = vadd.f32 %v889, %v922
    %v931 = vadd.f32 %v890, %v923
    %932 = vset.pattern.permute.xlu0 6
    %933 = vperm.xlu0 %932, %v498
    %v934 = vpop.permute.xlu0 %933
    %v936 = vmul.f32 %v934, %v708
    %v937 = vmul.f32 %v934, %v709
    %v938 = vmul.f32 %v934, %v710
    %v939 = vmul.f32 %v934, %v711
    %v940 = vmul.f32 %v934, %v712
    %v941 = vmul.f32 %v934, %v713
    %948 = vrot.lane.b32.xlu0 %v936, 122
    %v949 = vpop.permute.xlu0 %948
    %950 = vrot.lane.b32.xlu0 %v937, 122
    %v951 = vpop.permute.xlu0 %950
    %952 = vrot.lane.b32.xlu0 %v938, 122
    %v953 = vpop.permute.xlu0 %952
    %954 = vrot.lane.b32.xlu0 %v939, 122
    %v955 = vpop.permute.xlu0 %954
    %956 = vrot.lane.b32.xlu0 %v940, 122
    %v957 = vpop.permute.xlu0 %956
    %958 = vrot.lane.b32.xlu0 %v941, 122
    %v959 = vpop.permute.xlu0 %958
    %vm960 = vcmask 998400
    %v961 = vsel %vm960, %v949, %v951
    %v962 = vsel %vm960, %v951, %v953
    %v963 = vsel %vm960, %v955, %v957
    %v964 = vsel %vm960, %v957, %v959
    %v969 = vadd.f32 %v928, %v961
    %v970 = vadd.f32 %v929, %v962
    %v971 = vadd.f32 %v930, %v963
    %v972 = vadd.f32 %v931, %v964
    %973 = vset.pattern.permute.xlu0 7
    %974 = vperm.xlu0 %973, %v498
    %v975 = vpop.permute.xlu0 %974
    %v977 = vmul.f32 %v975, %v514
    %v978 = vmul.f32 %v975, %v515
    %v979 = vmul.f32 %v975, %v516
    %v980 = vmul.f32 %v975, %v517
    %v981 = vmul.f32 %v975, %v518
    %v982 = vmul.f32 %v975, %v519
    %989 = vrot.lane.b32.xlu0 %v977, 112
    %v990 = vpop.permute.xlu0 %989
    %991 = vrot.lane.b32.xlu0 %v978, 112
    %v992 = vpop.permute.xlu0 %991
    %993 = vrot.lane.b32.xlu0 %v979, 112
    %v994 = vpop.permute.xlu0 %993
    %995 = vrot.lane.b32.xlu0 %v980, 112
    %v996 = vpop.permute.xlu0 %995
    %997 = vrot.lane.b32.xlu0 %v981, 112
    %v998 = vpop.permute.xlu0 %997
    %999 = vrot.lane.b32.xlu0 %v982, 112
    %v1000 = vpop.permute.xlu0 %999
    %vm1001 = vcmask 916480
    %v1002 = vsel %vm1001, %v990, %v992
    %v1003 = vsel %vm1001, %v992, %v994
    %v1004 = vsel %vm1001, %v996, %v998
    %v1005 = vsel %vm1001, %v998, %v1000
    %v1010 = vadd.f32 %v969, %v1002
    %v1011 = vadd.f32 %v970, %v1003
    %v1012 = vadd.f32 %v971, %v1004
    %v1013 = vadd.f32 %v972, %v1005
    %1014 = vset.pattern.permute.xlu0 8
    %1015 = vperm.xlu0 %1014, %v498
    %v1016 = vpop.permute.xlu0 %1015
    %v1018 = vmul.f32 %v1016, %v546
    %v1019 = vmul.f32 %v1016, %v547
    %v1020 = vmul.f32 %v1016, %v548
    %v1021 = vmul.f32 %v1016, %v549
    %v1022 = vmul.f32 %v1016, %v550
    %v1023 = vmul.f32 %v1016, %v551
    %1030 = vrot.lane.b32.xlu0 %v1018, 111
    %v1031 = vpop.permute.xlu0 %1030
    %1032 = vrot.lane.b32.xlu0 %v1019, 111
    %v1033 = vpop.permute.xlu0 %1032
    %1034 = vrot.lane.b32.xlu0 %v1020, 111
    %v1035 = vpop.permute.xlu0 %1034
    %1036 = vrot.lane.b32.xlu0 %v1021, 111
    %v1037 = vpop.permute.xlu0 %1036
    %1038 = vrot.lane.b32.xlu0 %v1022, 111
    %v1039 = vpop.permute.xlu0 %1038
    %1040 = vrot.lane.b32.xlu0 %v1023, 111
    %v1041 = vpop.permute.xlu0 %1040
    %vm1042 = vcmask 908288
    %v1043 = vsel %vm1042, %v1031, %v1033
    %v1044 = vsel %vm1042, %v1033, %v1035
    %v1045 = vsel %vm1042, %v1037, %v1039
    %v1046 = vsel %vm1042, %v1039, %v1041
    %v1051 = vadd.f32 %v1010, %v1043
    %v1052 = vadd.f32 %v1011, %v1044
    %v1053 = vadd.f32 %v1012, %v1045
    %v1054 = vadd.f32 %v1013, %v1046
    %1055 = vset.pattern.permute.xlu0 9
    %1056 = vperm.xlu0 %1055, %v498
    %v1057 = vpop.permute.xlu0 %1056
    %v1059 = vmul.f32 %v1057, %v578
    %v1060 = vmul.f32 %v1057, %v579
    %v1061 = vmul.f32 %v1057, %v580
    %v1062 = vmul.f32 %v1057, %v581
    %v1063 = vmul.f32 %v1057, %v582
    %v1064 = vmul.f32 %v1057, %v583
    %1071 = vrot.lane.b32.xlu0 %v1059, 110
    %v1072 = vpop.permute.xlu0 %1071
    %1073 = vrot.lane.b32.xlu0 %v1060, 110
    %v1074 = vpop.permute.xlu0 %1073
    %1075 = vrot.lane.b32.xlu0 %v1061, 110
    %v1076 = vpop.permute.xlu0 %1075
    %1077 = vrot.lane.b32.xlu0 %v1062, 110
    %v1078 = vpop.permute.xlu0 %1077
    %1079 = vrot.lane.b32.xlu0 %v1063, 110
    %v1080 = vpop.permute.xlu0 %1079
    %1081 = vrot.lane.b32.xlu0 %v1064, 110
    %v1082 = vpop.permute.xlu0 %1081
    %vm1083 = vcmask 900096
    %v1084 = vsel %vm1083, %v1072, %v1074
    %v1085 = vsel %vm1083, %v1074, %v1076
    %v1086 = vsel %vm1083, %v1078, %v1080
    %v1087 = vsel %vm1083, %v1080, %v1082
    %v1092 = vadd.f32 %v1051, %v1084
    %v1093 = vadd.f32 %v1052, %v1085
    %v1094 = vadd.f32 %v1053, %v1086
    %v1095 = vadd.f32 %v1054, %v1087
    %1096 = vset.pattern.permute.xlu0 10
    %1097 = vperm.xlu0 %1096, %v498
    %v1098 = vpop.permute.xlu0 %1097
    %v1100 = vmul.f32 %v1098, %v610
    %v1101 = vmul.f32 %v1098, %v611
    %v1102 = vmul.f32 %v1098, %v612
    %v1103 = vmul.f32 %v1098, %v613
    %v1104 = vmul.f32 %v1098, %v614
    %v1105 = vmul.f32 %v1098, %v615
    %1112 = vrot.lane.b32.xlu0 %v1100, 109
    %v1113 = vpop.permute.xlu0 %1112
    %1114 = vrot.lane.b32.xlu0 %v1101, 109
    %v1115 = vpop.permute.xlu0 %1114
    %1116 = vrot.lane.b32.xlu0 %v1102, 109
    %v1117 = vpop.permute.xlu0 %1116
    %1118 = vrot.lane.b32.xlu0 %v1103, 109
    %v1119 = vpop.permute.xlu0 %1118
    %1120 = vrot.lane.b32.xlu0 %v1104, 109
    %v1121 = vpop.permute.xlu0 %1120
    %1122 = vrot.lane.b32.xlu0 %v1105, 109
    %v1123 = vpop.permute.xlu0 %1122
    %vm1124 = vcmask 891904
    %v1125 = vsel %vm1124, %v1113, %v1115
    %v1126 = vsel %vm1124, %v1115, %v1117
    %v1127 = vsel %vm1124, %v1119, %v1121
    %v1128 = vsel %vm1124, %v1121, %v1123
    %v1133 = vadd.f32 %v1092, %v1125
    %v1134 = vadd.f32 %v1093, %v1126
    %v1135 = vadd.f32 %v1094, %v1127
    %v1136 = vadd.f32 %v1095, %v1128
    %1137 = vset.pattern.permute.xlu0 11
    %1138 = vperm.xlu0 %1137, %v498
    %v1139 = vpop.permute.xlu0 %1138
    %v1141 = vmul.f32 %v1139, %v642
    %v1142 = vmul.f32 %v1139, %v643
    %v1143 = vmul.f32 %v1139, %v644
    %v1144 = vmul.f32 %v1139, %v645
    %v1145 = vmul.f32 %v1139, %v646
    %v1146 = vmul.f32 %v1139, %v647
    %1153 = vrot.lane.b32.xlu0 %v1141, 108
    %v1154 = vpop.permute.xlu0 %1153
    %1155 = vrot.lane.b32.xlu0 %v1142, 108
    %v1156 = vpop.permute.xlu0 %1155
    %1157 = vrot.lane.b32.xlu0 %v1143, 108
    %v1158 = vpop.permute.xlu0 %1157
    %1159 = vrot.lane.b32.xlu0 %v1144, 108
    %v1160 = vpop.permute.xlu0 %1159
    %1161 = vrot.lane.b32.xlu0 %v1145, 108
    %v1162 = vpop.permute.xlu0 %1161
    %1163 = vrot.lane.b32.xlu0 %v1146, 108
    %v1164 = vpop.permute.xlu0 %1163
    %vm1165 = vcmask 883712
    %v1166 = vsel %vm1165, %v1154, %v1156
    %v1167 = vsel %vm1165, %v1156, %v1158
    %v1168 = vsel %vm1165, %v1160, %v1162
    %v1169 = vsel %vm1165, %v1162, %v1164
    %v1174 = vadd.f32 %v1133, %v1166
    %v1175 = vadd.f32 %v1134, %v1167
    %v1176 = vadd.f32 %v1135, %v1168
    %v1177 = vadd.f32 %v1136, %v1169
    %1178 = vset.pattern.permute.xlu0 12
    %1179 = vperm.xlu0 %1178, %v498
    %v1180 = vpop.permute.xlu0 %1179
    %v1182 = vmul.f32 %v1180, %v675
    %v1183 = vmul.f32 %v1180, %v676
    %v1184 = vmul.f32 %v1180, %v677
    %v1185 = vmul.f32 %v1180, %v678
    %v1186 = vmul.f32 %v1180, %v679
    %v1187 = vmul.f32 %v1180, %v680
    %1194 = vrot.lane.b32.xlu0 %v1182, 107
    %v1195 = vpop.permute.xlu0 %1194
    %1196 = vrot.lane.b32.xlu0 %v1183, 107
    %v1197 = vpop.permute.xlu0 %1196
    %1198 = vrot.lane.b32.xlu0 %v1184, 107
    %v1199 = vpop.permute.xlu0 %1198
    %1200 = vrot.lane.b32.xlu0 %v1185, 107
    %v1201 = vpop.permute.xlu0 %1200
    %1202 = vrot.lane.b32.xlu0 %v1186, 107
    %v1203 = vpop.permute.xlu0 %1202
    %1204 = vrot.lane.b32.xlu0 %v1187, 107
    %v1205 = vpop.permute.xlu0 %1204
    %vm1206 = vcmask 875520
    %v1207 = vsel %vm1206, %v1195, %v1197
    %v1208 = vsel %vm1206, %v1197, %v1199
    %v1209 = vsel %vm1206, %v1201, %v1203
    %v1210 = vsel %vm1206, %v1203, %v1205
    %v1215 = vadd.f32 %v1174, %v1207
    %v1216 = vadd.f32 %v1175, %v1208
    %v1217 = vadd.f32 %v1176, %v1209
    %v1218 = vadd.f32 %v1177, %v1210
    %1219 = vset.pattern.permute.xlu0 13
    %1220 = vperm.xlu0 %1219, %v498
    %v1221 = vpop.permute.xlu0 %1220
    %v1223 = vmul.f32 %v1221, %v708
    %v1224 = vmul.f32 %v1221, %v709
    %v1225 = vmul.f32 %v1221, %v710
    %v1226 = vmul.f32 %v1221, %v711
    %v1227 = vmul.f32 %v1221, %v712
    %v1228 = vmul.f32 %v1221, %v713
    %1235 = vrot.lane.b32.xlu0 %v1223, 106
    %v1236 = vpop.permute.xlu0 %1235
    %1237 = vrot.lane.b32.xlu0 %v1224, 106
    %v1238 = vpop.permute.xlu0 %1237
    %1239 = vrot.lane.b32.xlu0 %v1225, 106
    %v1240 = vpop.permute.xlu0 %1239
    %1241 = vrot.lane.b32.xlu0 %v1226, 106
    %v1242 = vpop.permute.xlu0 %1241
    %1243 = vrot.lane.b32.xlu0 %v1227, 106
    %v1244 = vpop.permute.xlu0 %1243
    %1245 = vrot.lane.b32.xlu0 %v1228, 106
    %v1246 = vpop.permute.xlu0 %1245
    %vm1247 = vcmask 867328
    %v1248 = vsel %vm1247, %v1236, %v1238
    %v1249 = vsel %vm1247, %v1238, %v1240
    %v1250 = vsel %vm1247, %v1242, %v1244
    %v1251 = vsel %vm1247, %v1244, %v1246
    %v1256 = vadd.f32 %v1215, %v1248
    %v1257 = vadd.f32 %v1216, %v1249
    %v1258 = vadd.f32 %v1217, %v1250
    %v1259 = vadd.f32 %v1218, %v1251
    %1260 = vset.pattern.permute.xlu0 14
    %1261 = vperm.xlu0 %1260, %v498
    %v1262 = vpop.permute.xlu0 %1261
    %v1264 = vmul.f32 %v1262, %v514
    %v1265 = vmul.f32 %v1262, %v515
    %v1266 = vmul.f32 %v1262, %v516
    %v1267 = vmul.f32 %v1262, %v517
    %v1268 = vmul.f32 %v1262, %v518
    %v1269 = vmul.f32 %v1262, %v519
    %1276 = vrot.lane.b32.xlu0 %v1264, 96
    %v1277 = vpop.permute.xlu0 %1276
    %1278 = vrot.lane.b32.xlu0 %v1265, 96
    %v1279 = vpop.permute.xlu0 %1278
    %1280 = vrot.lane.b32.xlu0 %v1266, 96
    %v1281 = vpop.permute.xlu0 %1280
    %1282 = vrot.lane.b32.xlu0 %v1267, 96
    %v1283 = vpop.permute.xlu0 %1282
    %1284 = vrot.lane.b32.xlu0 %v1268, 96
    %v1285 = vpop.permute.xlu0 %1284
    %1286 = vrot.lane.b32.xlu0 %v1269, 96
    %v1287 = vpop.permute.xlu0 %1286
    %vm1288 = vcmask 785408
    %v1289 = vsel %vm1288, %v1277, %v1279
    %v1290 = vsel %vm1288, %v1279, %v1281
    %v1291 = vsel %vm1288, %v1283, %v1285
    %v1292 = vsel %vm1288, %v1285, %v1287
    %v1297 = vadd.f32 %v1256, %v1289
    %v1298 = vadd.f32 %v1257, %v1290
    %v1299 = vadd.f32 %v1258, %v1291
    %v1300 = vadd.f32 %v1259, %v1292
    %1301 = vset.pattern.permute.xlu0 15
    %1302 = vperm.xlu0 %1301, %v498
    %v1303 = vpop.permute.xlu0 %1302
    %v1305 = vmul.f32 %v1303, %v546
    %v1306 = vmul.f32 %v1303, %v547
    %v1307 = vmul.f32 %v1303, %v548
    %v1308 = vmul.f32 %v1303, %v549
    %v1309 = vmul.f32 %v1303, %v550
    %v1310 = vmul.f32 %v1303, %v551
    %1317 = vrot.lane.b32.xlu0 %v1305, 95
    %v1318 = vpop.permute.xlu0 %1317
    %1319 = vrot.lane.b32.xlu0 %v1306, 95
    %v1320 = vpop.permute.xlu0 %1319
    %1321 = vrot.lane.b32.xlu0 %v1307, 95
    %v1322 = vpop.permute.xlu0 %1321
    %1323 = vrot.lane.b32.xlu0 %v1308, 95
    %v1324 = vpop.permute.xlu0 %1323
    %1325 = vrot.lane.b32.xlu0 %v1309, 95
    %v1326 = vpop.permute.xlu0 %1325
    %1327 = vrot.lane.b32.xlu0 %v1310, 95
    %v1328 = vpop.permute.xlu0 %1327
    %vm1329 = vcmask 777216
    %v1330 = vsel %vm1329, %v1318, %v1320
    %v1331 = vsel %vm1329, %v1320, %v1322
    %v1332 = vsel %vm1329, %v1324, %v1326
    %v1333 = vsel %vm1329, %v1326, %v1328
    %v1338 = vadd.f32 %v1297, %v1330
    %v1339 = vadd.f32 %v1298, %v1331
    %v1340 = vadd.f32 %v1299, %v1332
    %v1341 = vadd.f32 %v1300, %v1333
    %1342 = vset.pattern.permute.xlu0 16
    %1343 = vperm.xlu0 %1342, %v498
    %v1344 = vpop.permute.xlu0 %1343
    %v1346 = vmul.f32 %v1344, %v578
    %v1347 = vmul.f32 %v1344, %v579
    %v1348 = vmul.f32 %v1344, %v580
    %v1349 = vmul.f32 %v1344, %v581
    %v1350 = vmul.f32 %v1344, %v582
    %v1351 = vmul.f32 %v1344, %v583
    %1358 = vrot.lane.b32.xlu0 %v1346, 94
    %v1359 = vpop.permute.xlu0 %1358
    %1360 = vrot.lane.b32.xlu0 %v1347, 94
    %v1361 = vpop.permute.xlu0 %1360
    %1362 = vrot.lane.b32.xlu0 %v1348, 94
    %v1363 = vpop.permute.xlu0 %1362
    %1364 = vrot.lane.b32.xlu0 %v1349, 94
    %v1365 = vpop.permute.xlu0 %1364
    %1366 = vrot.lane.b32.xlu0 %v1350, 94
    %v1367 = vpop.permute.xlu0 %1366
    %1368 = vrot.lane.b32.xlu0 %v1351, 94
    %v1369 = vpop.permute.xlu0 %1368
    %vm1370 = vcmask 769024
    %v1371 = vsel %vm1370, %v1359, %v1361
    %v1372 = vsel %vm1370, %v1361, %v1363
    %v1373 = vsel %vm1370, %v1365, %v1367
    %v1374 = vsel %vm1370, %v1367, %v1369
    %v1379 = vadd.f32 %v1338, %v1371
    %v1380 = vadd.f32 %v1339, %v1372
    %v1381 = vadd.f32 %v1340, %v1373
    %v1382 = vadd.f32 %v1341, %v1374
    %1383 = vset.pattern.permute.xlu0 17
    %1384 = vperm.xlu0 %1383, %v498
    %v1385 = vpop.permute.xlu0 %1384
    %v1387 = vmul.f32 %v1385, %v610
    %v1388 = vmul.f32 %v1385, %v611
    %v1389 = vmul.f32 %v1385, %v612
    %v1390 = vmul.f32 %v1385, %v613
    %v1391 = vmul.f32 %v1385, %v614
    %v1392 = vmul.f32 %v1385, %v615
    %1399 = vrot.lane.b32.xlu0 %v1387, 93
    %v1400 = vpop.permute.xlu0 %1399
    %1401 = vrot.lane.b32.xlu0 %v1388, 93
    %v1402 = vpop.permute.xlu0 %1401
    %1403 = vrot.lane.b32.xlu0 %v1389, 93
    %v1404 = vpop.permute.xlu0 %1403
    %1405 = vrot.lane.b32.xlu0 %v1390, 93
    %v1406 = vpop.permute.xlu0 %1405
    %1407 = vrot.lane.b32.xlu0 %v1391, 93
    %v1408 = vpop.permute.xlu0 %1407
    %1409 = vrot.lane.b32.xlu0 %v1392, 93
    %v1410 = vpop.permute.xlu0 %1409
    %vm1411 = vcmask 760832
    %v1412 = vsel %vm1411, %v1400, %v1402
    %v1413 = vsel %vm1411, %v1402, %v1404
    %v1414 = vsel %vm1411, %v1406, %v1408
    %v1415 = vsel %vm1411, %v1408, %v1410
    %v1420 = vadd.f32 %v1379, %v1412
    %v1421 = vadd.f32 %v1380, %v1413
    %v1422 = vadd.f32 %v1381, %v1414
    %v1423 = vadd.f32 %v1382, %v1415
    %1424 = vset.pattern.permute.xlu0 18
    %1425 = vperm.xlu0 %1424, %v498
    %v1426 = vpop.permute.xlu0 %1425
    %v1428 = vmul.f32 %v1426, %v642
    %v1429 = vmul.f32 %v1426, %v643
    %v1430 = vmul.f32 %v1426, %v644
    %v1431 = vmul.f32 %v1426, %v645
    %v1432 = vmul.f32 %v1426, %v646
    %v1433 = vmul.f32 %v1426, %v647
    %1440 = vrot.lane.b32.xlu0 %v1428, 92
    %v1441 = vpop.permute.xlu0 %1440
    %1442 = vrot.lane.b32.xlu0 %v1429, 92
    %v1443 = vpop.permute.xlu0 %1442
    %1444 = vrot.lane.b32.xlu0 %v1430, 92
    %v1445 = vpop.permute.xlu0 %1444
    %1446 = vrot.lane.b32.xlu0 %v1431, 92
    %v1447 = vpop.permute.xlu0 %1446
    %1448 = vrot.lane.b32.xlu0 %v1432, 92
    %v1449 = vpop.permute.xlu0 %1448
    %1450 = vrot.lane.b32.xlu0 %v1433, 92
    %v1451 = vpop.permute.xlu0 %1450
    %vm1452 = vcmask 752640
    %v1453 = vsel %vm1452, %v1441, %v1443
    %v1454 = vsel %vm1452, %v1443, %v1445
    %v1455 = vsel %vm1452, %v1447, %v1449
    %v1456 = vsel %vm1452, %v1449, %v1451
    %v1461 = vadd.f32 %v1420, %v1453
    %v1462 = vadd.f32 %v1421, %v1454
    %v1463 = vadd.f32 %v1422, %v1455
    %v1464 = vadd.f32 %v1423, %v1456
    %1465 = vset.pattern.permute.xlu0 19
    %1466 = vperm.xlu0 %1465, %v498
    %v1467 = vpop.permute.xlu0 %1466
    %v1469 = vmul.f32 %v1467, %v675
    %v1470 = vmul.f32 %v1467, %v676
    %v1471 = vmul.f32 %v1467, %v677
    %v1472 = vmul.f32 %v1467, %v678
    %v1473 = vmul.f32 %v1467, %v679
    %v1474 = vmul.f32 %v1467, %v680
    %1481 = vrot.lane.b32.xlu0 %v1469, 91
    %v1482 = vpop.permute.xlu0 %1481
    %1483 = vrot.lane.b32.xlu0 %v1470, 91
    %v1484 = vpop.permute.xlu0 %1483
    %1485 = vrot.lane.b32.xlu0 %v1471, 91
    %v1486 = vpop.permute.xlu0 %1485
    %1487 = vrot.lane.b32.xlu0 %v1472, 91
    %v1488 = vpop.permute.xlu0 %1487
    %1489 = vrot.lane.b32.xlu0 %v1473, 91
    %v1490 = vpop.permute.xlu0 %1489
    %1491 = vrot.lane.b32.xlu0 %v1474, 91
    %v1492 = vpop.permute.xlu0 %1491
    %vm1493 = vcmask 744448
    %v1494 = vsel %vm1493, %v1482, %v1484
    %v1495 = vsel %vm1493, %v1484, %v1486
    %v1496 = vsel %vm1493, %v1488, %v1490
    %v1497 = vsel %vm1493, %v1490, %v1492
    %v1502 = vadd.f32 %v1461, %v1494
    %v1503 = vadd.f32 %v1462, %v1495
    %v1504 = vadd.f32 %v1463, %v1496
    %v1505 = vadd.f32 %v1464, %v1497
    %1506 = vset.pattern.permute.xlu0 20
    %1507 = vperm.xlu0 %1506, %v498
    %v1508 = vpop.permute.xlu0 %1507
    %v1510 = vmul.f32 %v1508, %v708
    %v1511 = vmul.f32 %v1508, %v709
    %v1512 = vmul.f32 %v1508, %v710
    %v1513 = vmul.f32 %v1508, %v711
    %v1514 = vmul.f32 %v1508, %v712
    %v1515 = vmul.f32 %v1508, %v713
    %1522 = vrot.lane.b32.xlu0 %v1510, 90
    %v1523 = vpop.permute.xlu0 %1522
    %1524 = vrot.lane.b32.xlu0 %v1511, 90
    %v1525 = vpop.permute.xlu0 %1524
    %1526 = vrot.lane.b32.xlu0 %v1512, 90
    %v1527 = vpop.permute.xlu0 %1526
    %1528 = vrot.lane.b32.xlu0 %v1513, 90
    %v1529 = vpop.permute.xlu0 %1528
    %1530 = vrot.lane.b32.xlu0 %v1514, 90
    %v1531 = vpop.permute.xlu0 %1530
    %1532 = vrot.lane.b32.xlu0 %v1515, 90
    %v1533 = vpop.permute.xlu0 %1532
    %vm1534 = vcmask 736256
    %v1535 = vsel %vm1534, %v1523, %v1525
    %v1536 = vsel %vm1534, %v1525, %v1527
    %v1537 = vsel %vm1534, %v1529, %v1531
    %v1538 = vsel %vm1534, %v1531, %v1533
    %v1543 = vadd.f32 %v1502, %v1535
    %v1544 = vadd.f32 %v1503, %v1536
    %v1545 = vadd.f32 %v1504, %v1537
    %v1546 = vadd.f32 %v1505, %v1538
    %1547 = vset.pattern.permute.xlu0 21
    %1548 = vperm.xlu0 %1547, %v498
    %v1549 = vpop.permute.xlu0 %1548
    %v1551 = vmul.f32 %v1549, %v514
    %v1552 = vmul.f32 %v1549, %v515
    %v1553 = vmul.f32 %v1549, %v516
    %v1554 = vmul.f32 %v1549, %v517
    %v1555 = vmul.f32 %v1549, %v518
    %v1556 = vmul.f32 %v1549, %v519
    %1563 = vrot.lane.b32.xlu0 %v1551, 80
    %v1564 = vpop.permute.xlu0 %1563
    %1565 = vrot.lane.b32.xlu0 %v1552, 80
    %v1566 = vpop.permute.xlu0 %1565
    %1567 = vrot.lane.b32.xlu0 %v1553, 80
    %v1568 = vpop.permute.xlu0 %1567
    %1569 = vrot.lane.b32.xlu0 %v1554, 80
    %v1570 = vpop.permute.xlu0 %1569
    %1571 = vrot.lane.b32.xlu0 %v1555, 80
    %v1572 = vpop.permute.xlu0 %1571
    %1573 = vrot.lane.b32.xlu0 %v1556, 80
    %v1574 = vpop.permute.xlu0 %1573
    %vm1575 = vcmask 654336
    %v1576 = vsel %vm1575, %v1564, %v1566
    %v1577 = vsel %vm1575, %v1566, %v1568
    %v1578 = vsel %vm1575, %v1570, %v1572
    %v1579 = vsel %vm1575, %v1572, %v1574
    %v1584 = vadd.f32 %v1543, %v1576
    %v1585 = vadd.f32 %v1544, %v1577
    %v1586 = vadd.f32 %v1545, %v1578
    %v1587 = vadd.f32 %v1546, %v1579
    %1588 = vset.pattern.permute.xlu0 22
    %1589 = vperm.xlu0 %1588, %v498
    %v1590 = vpop.permute.xlu0 %1589
    %v1592 = vmul.f32 %v1590, %v546
    %v1593 = vmul.f32 %v1590, %v547
    %v1594 = vmul.f32 %v1590, %v548
    %v1595 = vmul.f32 %v1590, %v549
    %v1596 = vmul.f32 %v1590, %v550
    %v1597 = vmul.f32 %v1590, %v551
    %1604 = vrot.lane.b32.xlu0 %v1592, 79
    %v1605 = vpop.permute.xlu0 %1604
    %1606 = vrot.lane.b32.xlu0 %v1593, 79
    %v1607 = vpop.permute.xlu0 %1606
    %1608 = vrot.lane.b32.xlu0 %v1594, 79
    %v1609 = vpop.permute.xlu0 %1608
    %1610 = vrot.lane.b32.xlu0 %v1595, 79
    %v1611 = vpop.permute.xlu0 %1610
    %1612 = vrot.lane.b32.xlu0 %v1596, 79
    %v1613 = vpop.permute.xlu0 %1612
    %1614 = vrot.lane.b32.xlu0 %v1597, 79
    %v1615 = vpop.permute.xlu0 %1614
    %vm1616 = vcmask 646144
    %v1617 = vsel %vm1616, %v1605, %v1607
    %v1618 = vsel %vm1616, %v1607, %v1609
    %v1619 = vsel %vm1616, %v1611, %v1613
    %v1620 = vsel %vm1616, %v1613, %v1615
    %v1625 = vadd.f32 %v1584, %v1617
    %v1626 = vadd.f32 %v1585, %v1618
    %v1627 = vadd.f32 %v1586, %v1619
    %v1628 = vadd.f32 %v1587, %v1620
    %1629 = vset.pattern.permute.xlu0 23
    %1630 = vperm.xlu0 %1629, %v498
    %v1631 = vpop.permute.xlu0 %1630
    %v1633 = vmul.f32 %v1631, %v578
    %v1634 = vmul.f32 %v1631, %v579
    %v1635 = vmul.f32 %v1631, %v580
    %v1636 = vmul.f32 %v1631, %v581
    %v1637 = vmul.f32 %v1631, %v582
    %v1638 = vmul.f32 %v1631, %v583
    %1645 = vrot.lane.b32.xlu0 %v1633, 78
    %v1646 = vpop.permute.xlu0 %1645
    %1647 = vrot.lane.b32.xlu0 %v1634, 78
    %v1648 = vpop.permute.xlu0 %1647
    %1649 = vrot.lane.b32.xlu0 %v1635, 78
    %v1650 = vpop.permute.xlu0 %1649
    %1651 = vrot.lane.b32.xlu0 %v1636, 78
    %v1652 = vpop.permute.xlu0 %1651
    %1653 = vrot.lane.b32.xlu0 %v1637, 78
    %v1654 = vpop.permute.xlu0 %1653
    %1655 = vrot.lane.b32.xlu0 %v1638, 78
    %v1656 = vpop.permute.xlu0 %1655
    %vm1657 = vcmask 637952
    %v1658 = vsel %vm1657, %v1646, %v1648
    %v1659 = vsel %vm1657, %v1648, %v1650
    %v1660 = vsel %vm1657, %v1652, %v1654
    %v1661 = vsel %vm1657, %v1654, %v1656
    %v1666 = vadd.f32 %v1625, %v1658
    %v1667 = vadd.f32 %v1626, %v1659
    %v1668 = vadd.f32 %v1627, %v1660
    %v1669 = vadd.f32 %v1628, %v1661
    %1670 = vset.pattern.permute.xlu0 24
    %1671 = vperm.xlu0 %1670, %v498
    %v1672 = vpop.permute.xlu0 %1671
    %v1674 = vmul.f32 %v1672, %v610
    %v1675 = vmul.f32 %v1672, %v611
    %v1676 = vmul.f32 %v1672, %v612
    %v1677 = vmul.f32 %v1672, %v613
    %v1678 = vmul.f32 %v1672, %v614
    %v1679 = vmul.f32 %v1672, %v615
    %1686 = vrot.lane.b32.xlu0 %v1674, 77
    %v1687 = vpop.permute.xlu0 %1686
    %1688 = vrot.lane.b32.xlu0 %v1675, 77
    %v1689 = vpop.permute.xlu0 %1688
    %1690 = vrot.lane.b32.xlu0 %v1676, 77
    %v1691 = vpop.permute.xlu0 %1690
    %1692 = vrot.lane.b32.xlu0 %v1677, 77
    %v1693 = vpop.permute.xlu0 %1692
    %1694 = vrot.lane.b32.xlu0 %v1678, 77
    %v1695 = vpop.permute.xlu0 %1694
    %1696 = vrot.lane.b32.xlu0 %v1679, 77
    %v1697 = vpop.permute.xlu0 %1696
    %vm1698 = vcmask 629760
    %v1699 = vsel %vm1698, %v1687, %v1689
    %v1700 = vsel %vm1698, %v1689, %v1691
    %v1701 = vsel %vm1698, %v1693, %v1695
    %v1702 = vsel %vm1698, %v1695, %v1697
    %v1707 = vadd.f32 %v1666, %v1699
    %v1708 = vadd.f32 %v1667, %v1700
    %v1709 = vadd.f32 %v1668, %v1701
    %v1710 = vadd.f32 %v1669, %v1702
    %1711 = vset.pattern.permute.xlu0 25
    %1712 = vperm.xlu0 %1711, %v498
    %v1713 = vpop.permute.xlu0 %1712
    %v1715 = vmul.f32 %v1713, %v642
    %v1716 = vmul.f32 %v1713, %v643
    %v1717 = vmul.f32 %v1713, %v644
    %v1718 = vmul.f32 %v1713, %v645
    %v1719 = vmul.f32 %v1713, %v646
    %v1720 = vmul.f32 %v1713, %v647
    %1727 = vrot.lane.b32.xlu0 %v1715, 76
    %v1728 = vpop.permute.xlu0 %1727
    %1729 = vrot.lane.b32.xlu0 %v1716, 76
    %v1730 = vpop.permute.xlu0 %1729
    %1731 = vrot.lane.b32.xlu0 %v1717, 76
    %v1732 = vpop.permute.xlu0 %1731
    %1733 = vrot.lane.b32.xlu0 %v1718, 76
    %v1734 = vpop.permute.xlu0 %1733
    %1735 = vrot.lane.b32.xlu0 %v1719, 76
    %v1736 = vpop.permute.xlu0 %1735
    %1737 = vrot.lane.b32.xlu0 %v1720, 76
    %v1738 = vpop.permute.xlu0 %1737
    %vm1739 = vcmask 621568
    %v1740 = vsel %vm1739, %v1728, %v1730
    %v1741 = vsel %vm1739, %v1730, %v1732
    %v1742 = vsel %vm1739, %v1734, %v1736
    %v1743 = vsel %vm1739, %v1736, %v1738
    %v1748 = vadd.f32 %v1707, %v1740
    %v1749 = vadd.f32 %v1708, %v1741
    %v1750 = vadd.f32 %v1709, %v1742
    %v1751 = vadd.f32 %v1710, %v1743
    %1752 = vset.pattern.permute.xlu0 26
    %1753 = vperm.xlu0 %1752, %v498
    %v1754 = vpop.permute.xlu0 %1753
    %v1756 = vmul.f32 %v1754, %v675
    %v1757 = vmul.f32 %v1754, %v676
    %v1758 = vmul.f32 %v1754, %v677
    %v1759 = vmul.f32 %v1754, %v678
    %v1760 = vmul.f32 %v1754, %v679
    %v1761 = vmul.f32 %v1754, %v680
    %1768 = vrot.lane.b32.xlu0 %v1756, 75
    %v1769 = vpop.permute.xlu0 %1768
    %1770 = vrot.lane.b32.xlu0 %v1757, 75
    %v1771 = vpop.permute.xlu0 %1770
    %1772 = vrot.lane.b32.xlu0 %v1758, 75
    %v1773 = vpop.permute.xlu0 %1772
    %1774 = vrot.lane.b32.xlu0 %v1759, 75
    %v1775 = vpop.permute.xlu0 %1774
    %1776 = vrot.lane.b32.xlu0 %v1760, 75
    %v1777 = vpop.permute.xlu0 %1776
    %1778 = vrot.lane.b32.xlu0 %v1761, 75
    %v1779 = vpop.permute.xlu0 %1778
    %vm1780 = vcmask 613376
    %v1781 = vsel %vm1780, %v1769, %v1771
    %v1782 = vsel %vm1780, %v1771, %v1773
    %v1783 = vsel %vm1780, %v1775, %v1777
    %v1784 = vsel %vm1780, %v1777, %v1779
    %v1789 = vadd.f32 %v1748, %v1781
    %v1790 = vadd.f32 %v1749, %v1782
    %v1791 = vadd.f32 %v1750, %v1783
    %v1792 = vadd.f32 %v1751, %v1784
    %1793 = vset.pattern.permute.xlu0 27
    %1794 = vperm.xlu0 %1793, %v498
    %v1795 = vpop.permute.xlu0 %1794
    %v1797 = vmul.f32 %v1795, %v708
    %v1798 = vmul.f32 %v1795, %v709
    %v1799 = vmul.f32 %v1795, %v710
    %v1800 = vmul.f32 %v1795, %v711
    %v1801 = vmul.f32 %v1795, %v712
    %v1802 = vmul.f32 %v1795, %v713
    %1809 = vrot.lane.b32.xlu0 %v1797, 74
    %v1810 = vpop.permute.xlu0 %1809
    %1811 = vrot.lane.b32.xlu0 %v1798, 74
    %v1812 = vpop.permute.xlu0 %1811
    %1813 = vrot.lane.b32.xlu0 %v1799, 74
    %v1814 = vpop.permute.xlu0 %1813
    %1815 = vrot.lane.b32.xlu0 %v1800, 74
    %v1816 = vpop.permute.xlu0 %1815
    %1817 = vrot.lane.b32.xlu0 %v1801, 74
    %v1818 = vpop.permute.xlu0 %1817
    %1819 = vrot.lane.b32.xlu0 %v1802, 74
    %v1820 = vpop.permute.xlu0 %1819
    %vm1821 = vcmask 605184
    %v1822 = vsel %vm1821, %v1810, %v1812
    %v1823 = vsel %vm1821, %v1812, %v1814
    %v1824 = vsel %vm1821, %v1816, %v1818
    %v1825 = vsel %vm1821, %v1818, %v1820
    %v1830 = vadd.f32 %v1789, %v1822
    %v1831 = vadd.f32 %v1790, %v1823
    %v1832 = vadd.f32 %v1791, %v1824
    %v1833 = vadd.f32 %v1792, %v1825
    %1834 = vset.pattern.permute.xlu0 28
    %1835 = vperm.xlu0 %1834, %v498
    %v1836 = vpop.permute.xlu0 %1835
    %v1838 = vmul.f32 %v1836, %v514
    %v1839 = vmul.f32 %v1836, %v515
    %v1840 = vmul.f32 %v1836, %v516
    %v1841 = vmul.f32 %v1836, %v517
    %v1842 = vmul.f32 %v1836, %v518
    %v1843 = vmul.f32 %v1836, %v519
    %1850 = vrot.lane.b32.xlu0 %v1838, 64
    %v1851 = vpop.permute.xlu0 %1850
    %1852 = vrot.lane.b32.xlu0 %v1839, 64
    %v1853 = vpop.permute.xlu0 %1852
    %1854 = vrot.lane.b32.xlu0 %v1840, 64
    %v1855 = vpop.permute.xlu0 %1854
    %1856 = vrot.lane.b32.xlu0 %v1841, 64
    %v1857 = vpop.permute.xlu0 %1856
    %1858 = vrot.lane.b32.xlu0 %v1842, 64
    %v1859 = vpop.permute.xlu0 %1858
    %1860 = vrot.lane.b32.xlu0 %v1843, 64
    %v1861 = vpop.permute.xlu0 %1860
    %vm1862 = vcmask 523264
    %v1863 = vsel %vm1862, %v1851, %v1853
    %v1864 = vsel %vm1862, %v1853, %v1855
    %v1865 = vsel %vm1862, %v1857, %v1859
    %v1866 = vsel %vm1862, %v1859, %v1861
    %v1871 = vadd.f32 %v1830, %v1863
    %v1872 = vadd.f32 %v1831, %v1864
    %v1873 = vadd.f32 %v1832, %v1865
    %v1874 = vadd.f32 %v1833, %v1866
    %1875 = vset.pattern.permute.xlu0 29
    %1876 = vperm.xlu0 %1875, %v498
    %v1877 = vpop.permute.xlu0 %1876
    %v1879 = vmul.f32 %v1877, %v546
    %v1880 = vmul.f32 %v1877, %v547
    %v1881 = vmul.f32 %v1877, %v548
    %v1882 = vmul.f32 %v1877, %v549
    %v1883 = vmul.f32 %v1877, %v550
    %v1884 = vmul.f32 %v1877, %v551
    %1891 = vrot.lane.b32.xlu0 %v1879, 63
    %v1892 = vpop.permute.xlu0 %1891
    %1893 = vrot.lane.b32.xlu0 %v1880, 63
    %v1894 = vpop.permute.xlu0 %1893
    %1895 = vrot.lane.b32.xlu0 %v1881, 63
    %v1896 = vpop.permute.xlu0 %1895
    %1897 = vrot.lane.b32.xlu0 %v1882, 63
    %v1898 = vpop.permute.xlu0 %1897
    %1899 = vrot.lane.b32.xlu0 %v1883, 63
    %v1900 = vpop.permute.xlu0 %1899
    %1901 = vrot.lane.b32.xlu0 %v1884, 63
    %v1902 = vpop.permute.xlu0 %1901
    %vm1903 = vcmask 515072
    %v1904 = vsel %vm1903, %v1892, %v1894
    %v1905 = vsel %vm1903, %v1894, %v1896
    %v1906 = vsel %vm1903, %v1898, %v1900
    %v1907 = vsel %vm1903, %v1900, %v1902
    %v1912 = vadd.f32 %v1871, %v1904
    %v1913 = vadd.f32 %v1872, %v1905
    %v1914 = vadd.f32 %v1873, %v1906
    %v1915 = vadd.f32 %v1874, %v1907
    %1916 = vset.pattern.permute.xlu0 30
    %1917 = vperm.xlu0 %1916, %v498
    %v1918 = vpop.permute.xlu0 %1917
    %v1920 = vmul.f32 %v1918, %v578
    %v1921 = vmul.f32 %v1918, %v579
    %v1922 = vmul.f32 %v1918, %v580
    %v1923 = vmul.f32 %v1918, %v581
    %v1924 = vmul.f32 %v1918, %v582
    %v1925 = vmul.f32 %v1918, %v583
    %1932 = vrot.lane.b32.xlu0 %v1920, 62
    %v1933 = vpop.permute.xlu0 %1932
    %1934 = vrot.lane.b32.xlu0 %v1921, 62
    %v1935 = vpop.permute.xlu0 %1934
    %1936 = vrot.lane.b32.xlu0 %v1922, 62
    %v1937 = vpop.permute.xlu0 %1936
    %1938 = vrot.lane.b32.xlu0 %v1923, 62
    %v1939 = vpop.permute.xlu0 %1938
    %1940 = vrot.lane.b32.xlu0 %v1924, 62
    %v1941 = vpop.permute.xlu0 %1940
    %1942 = vrot.lane.b32.xlu0 %v1925, 62
    %v1943 = vpop.permute.xlu0 %1942
    %vm1944 = vcmask 506880
    %v1945 = vsel %vm1944, %v1933, %v1935
    %v1946 = vsel %vm1944, %v1935, %v1937
    %v1947 = vsel %vm1944, %v1939, %v1941
    %v1948 = vsel %vm1944, %v1941, %v1943
    %v1953 = vadd.f32 %v1912, %v1945
    %v1954 = vadd.f32 %v1913, %v1946
    %v1955 = vadd.f32 %v1914, %v1947
    %v1956 = vadd.f32 %v1915, %v1948
    %1957 = vset.pattern.permute.xlu0 31
    %1958 = vperm.xlu0 %1957, %v498
    %v1959 = vpop.permute.xlu0 %1958
    %v1961 = vmul.f32 %v1959, %v610
    %v1962 = vmul.f32 %v1959, %v611
    %v1963 = vmul.f32 %v1959, %v612
    %v1964 = vmul.f32 %v1959, %v613
    %v1965 = vmul.f32 %v1959, %v614
    %v1966 = vmul.f32 %v1959, %v615
    %1973 = vrot.lane.b32.xlu0 %v1961, 61
    %v1974 = vpop.permute.xlu0 %1973
    %1975 = vrot.lane.b32.xlu0 %v1962, 61
    %v1976 = vpop.permute.xlu0 %1975
    %1977 = vrot.lane.b32.xlu0 %v1963, 61
    %v1978 = vpop.permute.xlu0 %1977
    %1979 = vrot.lane.b32.xlu0 %v1964, 61
    %v1980 = vpop.permute.xlu0 %1979
    %1981 = vrot.lane.b32.xlu0 %v1965, 61
    %v1982 = vpop.permute.xlu0 %1981
    %1983 = vrot.lane.b32.xlu0 %v1966, 61
    %v1984 = vpop.permute.xlu0 %1983
    %vm1985 = vcmask 498688
    %v1986 = vsel %vm1985, %v1974, %v1976
    %v1987 = vsel %vm1985, %v1976, %v1978
    %v1988 = vsel %vm1985, %v1980, %v1982
    %v1989 = vsel %vm1985, %v1982, %v1984
    %v1994 = vadd.f32 %v1953, %v1986
    %v1995 = vadd.f32 %v1954, %v1987
    %v1996 = vadd.f32 %v1955, %v1988
    %v1997 = vadd.f32 %v1956, %v1989
    %1998 = vset.pattern.permute.xlu0 32
    %1999 = vperm.xlu0 %1998, %v498
    %v2000 = vpop.permute.xlu0 %1999
    %v2002 = vmul.f32 %v2000, %v642
    %v2003 = vmul.f32 %v2000, %v643
    %v2004 = vmul.f32 %v2000, %v644
    %v2005 = vmul.f32 %v2000, %v645
    %v2006 = vmul.f32 %v2000, %v646
    %v2007 = vmul.f32 %v2000, %v647
    %2014 = vrot.lane.b32.xlu0 %v2002, 60
    %v2015 = vpop.permute.xlu0 %2014
    %2016 = vrot.lane.b32.xlu0 %v2003, 60
    %v2017 = vpop.permute.xlu0 %2016
    %2018 = vrot.lane.b32.xlu0 %v2004, 60
    %v2019 = vpop.permute.xlu0 %2018
    %2020 = vrot.lane.b32.xlu0 %v2005, 60
    %v2021 = vpop.permute.xlu0 %2020
    %2022 = vrot.lane.b32.xlu0 %v2006, 60
    %v2023 = vpop.permute.xlu0 %2022
    %2024 = vrot.lane.b32.xlu0 %v2007, 60
    %v2025 = vpop.permute.xlu0 %2024
    %vm2026 = vcmask 490496
    %v2027 = vsel %vm2026, %v2015, %v2017
    %v2028 = vsel %vm2026, %v2017, %v2019
    %v2029 = vsel %vm2026, %v2021, %v2023
    %v2030 = vsel %vm2026, %v2023, %v2025
    %v2035 = vadd.f32 %v1994, %v2027
    %v2036 = vadd.f32 %v1995, %v2028
    %v2037 = vadd.f32 %v1996, %v2029
    %v2038 = vadd.f32 %v1997, %v2030
    %2039 = vset.pattern.permute.xlu0 33
    %2040 = vperm.xlu0 %2039, %v498
    %v2041 = vpop.permute.xlu0 %2040
    %v2043 = vmul.f32 %v2041, %v675
    %v2044 = vmul.f32 %v2041, %v676
    %v2045 = vmul.f32 %v2041, %v677
    %v2046 = vmul.f32 %v2041, %v678
    %v2047 = vmul.f32 %v2041, %v679
    %v2048 = vmul.f32 %v2041, %v680
    %2055 = vrot.lane.b32.xlu0 %v2043, 59
    %v2056 = vpop.permute.xlu0 %2055
    %2057 = vrot.lane.b32.xlu0 %v2044, 59
    %v2058 = vpop.permute.xlu0 %2057
    %2059 = vrot.lane.b32.xlu0 %v2045, 59
    %v2060 = vpop.permute.xlu0 %2059
    %2061 = vrot.lane.b32.xlu0 %v2046, 59
    %v2062 = vpop.permute.xlu0 %2061
    %2063 = vrot.lane.b32.xlu0 %v2047, 59
    %v2064 = vpop.permute.xlu0 %2063
    %2065 = vrot.lane.b32.xlu0 %v2048, 59
    %v2066 = vpop.permute.xlu0 %2065
    %vm2067 = vcmask 482304
    %v2068 = vsel %vm2067, %v2056, %v2058
    %v2069 = vsel %vm2067, %v2058, %v2060
    %v2070 = vsel %vm2067, %v2062, %v2064
    %v2071 = vsel %vm2067, %v2064, %v2066
    %v2076 = vadd.f32 %v2035, %v2068
    %v2077 = vadd.f32 %v2036, %v2069
    %v2078 = vadd.f32 %v2037, %v2070
    %v2079 = vadd.f32 %v2038, %v2071
    %2080 = vset.pattern.permute.xlu0 34
    %2081 = vperm.xlu0 %2080, %v498
    %v2082 = vpop.permute.xlu0 %2081
    %v2084 = vmul.f32 %v2082, %v708
    %v2085 = vmul.f32 %v2082, %v709
    %v2086 = vmul.f32 %v2082, %v710
    %v2087 = vmul.f32 %v2082, %v711
    %v2088 = vmul.f32 %v2082, %v712
    %v2089 = vmul.f32 %v2082, %v713
    %2096 = vrot.lane.b32.xlu0 %v2084, 58
    %v2097 = vpop.permute.xlu0 %2096
    %2098 = vrot.lane.b32.xlu0 %v2085, 58
    %v2099 = vpop.permute.xlu0 %2098
    %2100 = vrot.lane.b32.xlu0 %v2086, 58
    %v2101 = vpop.permute.xlu0 %2100
    %2102 = vrot.lane.b32.xlu0 %v2087, 58
    %v2103 = vpop.permute.xlu0 %2102
    %2104 = vrot.lane.b32.xlu0 %v2088, 58
    %v2105 = vpop.permute.xlu0 %2104
    %2106 = vrot.lane.b32.xlu0 %v2089, 58
    %v2107 = vpop.permute.xlu0 %2106
    %vm2108 = vcmask 474112
    %v2109 = vsel %vm2108, %v2097, %v2099
    %v2110 = vsel %vm2108, %v2099, %v2101
    %v2111 = vsel %vm2108, %v2103, %v2105
    %v2112 = vsel %vm2108, %v2105, %v2107
    %v2117 = vadd.f32 %v2076, %v2109
    %v2118 = vadd.f32 %v2077, %v2110
    %v2119 = vadd.f32 %v2078, %v2111
    %v2120 = vadd.f32 %v2079, %v2112
    %2121 = vset.pattern.permute.xlu0 35
    %2122 = vperm.xlu0 %2121, %v498
    %v2123 = vpop.permute.xlu0 %2122
    %v2125 = vmul.f32 %v2123, %v514
    %v2126 = vmul.f32 %v2123, %v515
    %v2127 = vmul.f32 %v2123, %v516
    %v2128 = vmul.f32 %v2123, %v517
    %v2129 = vmul.f32 %v2123, %v518
    %v2130 = vmul.f32 %v2123, %v519
    %2137 = vrot.lane.b32.xlu0 %v2125, 48
    %v2138 = vpop.permute.xlu0 %2137
    %2139 = vrot.lane.b32.xlu0 %v2126, 48
    %v2140 = vpop.permute.xlu0 %2139
    %2141 = vrot.lane.b32.xlu0 %v2127, 48
    %v2142 = vpop.permute.xlu0 %2141
    %2143 = vrot.lane.b32.xlu0 %v2128, 48
    %v2144 = vpop.permute.xlu0 %2143
    %2145 = vrot.lane.b32.xlu0 %v2129, 48
    %v2146 = vpop.permute.xlu0 %2145
    %2147 = vrot.lane.b32.xlu0 %v2130, 48
    %v2148 = vpop.permute.xlu0 %2147
    %vm2149 = vcmask 392192
    %v2150 = vsel %vm2149, %v2138, %v2140
    %v2151 = vsel %vm2149, %v2140, %v2142
    %v2152 = vsel %vm2149, %v2144, %v2146
    %v2153 = vsel %vm2149, %v2146, %v2148
    %v2158 = vadd.f32 %v2117, %v2150
    %v2159 = vadd.f32 %v2118, %v2151
    %v2160 = vadd.f32 %v2119, %v2152
    %v2161 = vadd.f32 %v2120, %v2153
    %2162 = vset.pattern.permute.xlu0 36
    %2163 = vperm.xlu0 %2162, %v498
    %v2164 = vpop.permute.xlu0 %2163
    %v2166 = vmul.f32 %v2164, %v546
    %v2167 = vmul.f32 %v2164, %v547
    %v2168 = vmul.f32 %v2164, %v548
    %v2169 = vmul.f32 %v2164, %v549
    %v2170 = vmul.f32 %v2164, %v550
    %v2171 = vmul.f32 %v2164, %v551
    %2178 = vrot.lane.b32.xlu0 %v2166, 47
    %v2179 = vpop.permute.xlu0 %2178
    %2180 = vrot.lane.b32.xlu0 %v2167, 47
    %v2181 = vpop.permute.xlu0 %2180
    %2182 = vrot.lane.b32.xlu0 %v2168, 47
    %v2183 = vpop.permute.xlu0 %2182
    %2184 = vrot.lane.b32.xlu0 %v2169, 47
    %v2185 = vpop.permute.xlu0 %2184
    %2186 = vrot.lane.b32.xlu0 %v2170, 47
    %v2187 = vpop.permute.xlu0 %2186
    %2188 = vrot.lane.b32.xlu0 %v2171, 47
    %v2189 = vpop.permute.xlu0 %2188
    %vm2190 = vcmask 384000
    %v2191 = vsel %vm2190, %v2179, %v2181
    %v2192 = vsel %vm2190, %v2181, %v2183
    %v2193 = vsel %vm2190, %v2185, %v2187
    %v2194 = vsel %vm2190, %v2187, %v2189
    %v2199 = vadd.f32 %v2158, %v2191
    %v2200 = vadd.f32 %v2159, %v2192
    %v2201 = vadd.f32 %v2160, %v2193
    %v2202 = vadd.f32 %v2161, %v2194
    %2203 = vset.pattern.permute.xlu0 37
    %2204 = vperm.xlu0 %2203, %v498
    %v2205 = vpop.permute.xlu0 %2204
    %v2207 = vmul.f32 %v2205, %v578
    %v2208 = vmul.f32 %v2205, %v579
    %v2209 = vmul.f32 %v2205, %v580
    %v2210 = vmul.f32 %v2205, %v581
    %v2211 = vmul.f32 %v2205, %v582
    %v2212 = vmul.f32 %v2205, %v583
    %2219 = vrot.lane.b32.xlu0 %v2207, 46
    %v2220 = vpop.permute.xlu0 %2219
    %2221 = vrot.lane.b32.xlu0 %v2208, 46
    %v2222 = vpop.permute.xlu0 %2221
    %2223 = vrot.lane.b32.xlu0 %v2209, 46
    %v2224 = vpop.permute.xlu0 %2223
    %2225 = vrot.lane.b32.xlu0 %v2210, 46
    %v2226 = vpop.permute.xlu0 %2225
    %2227 = vrot.lane.b32.xlu0 %v2211, 46
    %v2228 = vpop.permute.xlu0 %2227
    %2229 = vrot.lane.b32.xlu0 %v2212, 46
    %v2230 = vpop.permute.xlu0 %2229
    %vm2231 = vcmask 375808
    %v2232 = vsel %vm2231, %v2220, %v2222
    %v2233 = vsel %vm2231, %v2222, %v2224
    %v2234 = vsel %vm2231, %v2226, %v2228
    %v2235 = vsel %vm2231, %v2228, %v2230
    %v2240 = vadd.f32 %v2199, %v2232
    %v2241 = vadd.f32 %v2200, %v2233
    %v2242 = vadd.f32 %v2201, %v2234
    %v2243 = vadd.f32 %v2202, %v2235
    %2244 = vset.pattern.permute.xlu0 38
    %2245 = vperm.xlu0 %2244, %v498
    %v2246 = vpop.permute.xlu0 %2245
    %v2248 = vmul.f32 %v2246, %v610
    %v2249 = vmul.f32 %v2246, %v611
    %v2250 = vmul.f32 %v2246, %v612
    %v2251 = vmul.f32 %v2246, %v613
    %v2252 = vmul.f32 %v2246, %v614
    %v2253 = vmul.f32 %v2246, %v615
    %2260 = vrot.lane.b32.xlu0 %v2248, 45
    %v2261 = vpop.permute.xlu0 %2260
    %2262 = vrot.lane.b32.xlu0 %v2249, 45
    %v2263 = vpop.permute.xlu0 %2262
    %2264 = vrot.lane.b32.xlu0 %v2250, 45
    %v2265 = vpop.permute.xlu0 %2264
    %2266 = vrot.lane.b32.xlu0 %v2251, 45
    %v2267 = vpop.permute.xlu0 %2266
    %2268 = vrot.lane.b32.xlu0 %v2252, 45
    %v2269 = vpop.permute.xlu0 %2268
    %2270 = vrot.lane.b32.xlu0 %v2253, 45
    %v2271 = vpop.permute.xlu0 %2270
    %vm2272 = vcmask 367616
    %v2273 = vsel %vm2272, %v2261, %v2263
    %v2274 = vsel %vm2272, %v2263, %v2265
    %v2275 = vsel %vm2272, %v2267, %v2269
    %v2276 = vsel %vm2272, %v2269, %v2271
    %v2281 = vadd.f32 %v2240, %v2273
    %v2282 = vadd.f32 %v2241, %v2274
    %v2283 = vadd.f32 %v2242, %v2275
    %v2284 = vadd.f32 %v2243, %v2276
    %2285 = vset.pattern.permute.xlu0 39
    %2286 = vperm.xlu0 %2285, %v498
    %v2287 = vpop.permute.xlu0 %2286
    %v2289 = vmul.f32 %v2287, %v642
    %v2290 = vmul.f32 %v2287, %v643
    %v2291 = vmul.f32 %v2287, %v644
    %v2292 = vmul.f32 %v2287, %v645
    %v2293 = vmul.f32 %v2287, %v646
    %v2294 = vmul.f32 %v2287, %v647
    %2301 = vrot.lane.b32.xlu0 %v2289, 44
    %v2302 = vpop.permute.xlu0 %2301
    %2303 = vrot.lane.b32.xlu0 %v2290, 44
    %v2304 = vpop.permute.xlu0 %2303
    %2305 = vrot.lane.b32.xlu0 %v2291, 44
    %v2306 = vpop.permute.xlu0 %2305
    %2307 = vrot.lane.b32.xlu0 %v2292, 44
    %v2308 = vpop.permute.xlu0 %2307
    %2309 = vrot.lane.b32.xlu0 %v2293, 44
    %v2310 = vpop.permute.xlu0 %2309
    %2311 = vrot.lane.b32.xlu0 %v2294, 44
    %v2312 = vpop.permute.xlu0 %2311
    %vm2313 = vcmask 359424
    %v2314 = vsel %vm2313, %v2302, %v2304
    %v2315 = vsel %vm2313, %v2304, %v2306
    %v2316 = vsel %vm2313, %v2308, %v2310
    %v2317 = vsel %vm2313, %v2310, %v2312
    %v2322 = vadd.f32 %v2281, %v2314
    %v2323 = vadd.f32 %v2282, %v2315
    %v2324 = vadd.f32 %v2283, %v2316
    %v2325 = vadd.f32 %v2284, %v2317
    %2326 = vset.pattern.permute.xlu0 40
    %2327 = vperm.xlu0 %2326, %v498
    %v2328 = vpop.permute.xlu0 %2327
    %v2330 = vmul.f32 %v2328, %v675
    %v2331 = vmul.f32 %v2328, %v676
    %v2332 = vmul.f32 %v2328, %v677
    %v2333 = vmul.f32 %v2328, %v678
    %v2334 = vmul.f32 %v2328, %v679
    %v2335 = vmul.f32 %v2328, %v680
    %2342 = vrot.lane.b32.xlu0 %v2330, 43
    %v2343 = vpop.permute.xlu0 %2342
    %2344 = vrot.lane.b32.xlu0 %v2331, 43
    %v2345 = vpop.permute.xlu0 %2344
    %2346 = vrot.lane.b32.xlu0 %v2332, 43
    %v2347 = vpop.permute.xlu0 %2346
    %2348 = vrot.lane.b32.xlu0 %v2333, 43
    %v2349 = vpop.permute.xlu0 %2348
    %2350 = vrot.lane.b32.xlu0 %v2334, 43
    %v2351 = vpop.permute.xlu0 %2350
    %2352 = vrot.lane.b32.xlu0 %v2335, 43
    %v2353 = vpop.permute.xlu0 %2352
    %vm2354 = vcmask 351232
    %v2355 = vsel %vm2354, %v2343, %v2345
    %v2356 = vsel %vm2354, %v2345, %v2347
    %v2357 = vsel %vm2354, %v2349, %v2351
    %v2358 = vsel %vm2354, %v2351, %v2353
    %v2363 = vadd.f32 %v2322, %v2355
    %v2364 = vadd.f32 %v2323, %v2356
    %v2365 = vadd.f32 %v2324, %v2357
    %v2366 = vadd.f32 %v2325, %v2358
    %2367 = vset.pattern.permute.xlu0 41
    %2368 = vperm.xlu0 %2367, %v498
    %v2369 = vpop.permute.xlu0 %2368
    %v2371 = vmul.f32 %v2369, %v708
    %v2372 = vmul.f32 %v2369, %v709
    %v2373 = vmul.f32 %v2369, %v710
    %v2374 = vmul.f32 %v2369, %v711
    %v2375 = vmul.f32 %v2369, %v712
    %v2376 = vmul.f32 %v2369, %v713
    %2383 = vrot.lane.b32.xlu0 %v2371, 42
    %v2384 = vpop.permute.xlu0 %2383
    %2385 = vrot.lane.b32.xlu0 %v2372, 42
    %v2386 = vpop.permute.xlu0 %2385
    %2387 = vrot.lane.b32.xlu0 %v2373, 42
    %v2388 = vpop.permute.xlu0 %2387
    %2389 = vrot.lane.b32.xlu0 %v2374, 42
    %v2390 = vpop.permute.xlu0 %2389
    %2391 = vrot.lane.b32.xlu0 %v2375, 42
    %v2392 = vpop.permute.xlu0 %2391
    %2393 = vrot.lane.b32.xlu0 %v2376, 42
    %v2394 = vpop.permute.xlu0 %2393
    %vm2395 = vcmask 343040
    %v2396 = vsel %vm2395, %v2384, %v2386
    %v2397 = vsel %vm2395, %v2386, %v2388
    %v2398 = vsel %vm2395, %v2390, %v2392
    %v2399 = vsel %vm2395, %v2392, %v2394
    %v2404 = vadd.f32 %v2363, %v2396
    %v2405 = vadd.f32 %v2364, %v2397
    %v2406 = vadd.f32 %v2365, %v2398
    %v2407 = vadd.f32 %v2366, %v2399
    %2408 = vset.pattern.permute.xlu0 42
    %2409 = vperm.xlu0 %2408, %v498
    %v2410 = vpop.permute.xlu0 %2409
    %v2412 = vmul.f32 %v2410, %v514
    %v2413 = vmul.f32 %v2410, %v515
    %v2414 = vmul.f32 %v2410, %v516
    %v2415 = vmul.f32 %v2410, %v517
    %v2416 = vmul.f32 %v2410, %v518
    %v2417 = vmul.f32 %v2410, %v519
    %2424 = vrot.lane.b32.xlu0 %v2412, 32
    %v2425 = vpop.permute.xlu0 %2424
    %2426 = vrot.lane.b32.xlu0 %v2413, 32
    %v2427 = vpop.permute.xlu0 %2426
    %2428 = vrot.lane.b32.xlu0 %v2414, 32
    %v2429 = vpop.permute.xlu0 %2428
    %2430 = vrot.lane.b32.xlu0 %v2415, 32
    %v2431 = vpop.permute.xlu0 %2430
    %2432 = vrot.lane.b32.xlu0 %v2416, 32
    %v2433 = vpop.permute.xlu0 %2432
    %2434 = vrot.lane.b32.xlu0 %v2417, 32
    %v2435 = vpop.permute.xlu0 %2434
    %vm2436 = vcmask 261120
    %v2437 = vsel %vm2436, %v2425, %v2427
    %v2438 = vsel %vm2436, %v2427, %v2429
    %v2439 = vsel %vm2436, %v2431, %v2433
    %v2440 = vsel %vm2436, %v2433, %v2435
    %v2445 = vadd.f32 %v2404, %v2437
    %v2446 = vadd.f32 %v2405, %v2438
    %v2447 = vadd.f32 %v2406, %v2439
    %v2448 = vadd.f32 %v2407, %v2440
    %2449 = vset.pattern.permute.xlu0 43
    %2450 = vperm.xlu0 %2449, %v498
    %v2451 = vpop.permute.xlu0 %2450
    %v2453 = vmul.f32 %v2451, %v546
    %v2454 = vmul.f32 %v2451, %v547
    %v2455 = vmul.f32 %v2451, %v548
    %v2456 = vmul.f32 %v2451, %v549
    %v2457 = vmul.f32 %v2451, %v550
    %v2458 = vmul.f32 %v2451, %v551
    %2465 = vrot.lane.b32.xlu0 %v2453, 31
    %v2466 = vpop.permute.xlu0 %2465
    %2467 = vrot.lane.b32.xlu0 %v2454, 31
    %v2468 = vpop.permute.xlu0 %2467
    %2469 = vrot.lane.b32.xlu0 %v2455, 31
    %v2470 = vpop.permute.xlu0 %2469
    %2471 = vrot.lane.b32.xlu0 %v2456, 31
    %v2472 = vpop.permute.xlu0 %2471
    %2473 = vrot.lane.b32.xlu0 %v2457, 31
    %v2474 = vpop.permute.xlu0 %2473
    %2475 = vrot.lane.b32.xlu0 %v2458, 31
    %v2476 = vpop.permute.xlu0 %2475
    %vm2477 = vcmask 252928
    %v2478 = vsel %vm2477, %v2466, %v2468
    %v2479 = vsel %vm2477, %v2468, %v2470
    %v2480 = vsel %vm2477, %v2472, %v2474
    %v2481 = vsel %vm2477, %v2474, %v2476
    %v2486 = vadd.f32 %v2445, %v2478
    %v2487 = vadd.f32 %v2446, %v2479
    %v2488 = vadd.f32 %v2447, %v2480
    %v2489 = vadd.f32 %v2448, %v2481
    %2490 = vset.pattern.permute.xlu0 44
    %2491 = vperm.xlu0 %2490, %v498
    %v2492 = vpop.permute.xlu0 %2491
    %v2494 = vmul.f32 %v2492, %v578
    %v2495 = vmul.f32 %v2492, %v579
    %v2496 = vmul.f32 %v2492, %v580
    %v2497 = vmul.f32 %v2492, %v581
    %v2498 = vmul.f32 %v2492, %v582
    %v2499 = vmul.f32 %v2492, %v583
    %2506 = vrot.lane.b32.xlu0 %v2494, 30
    %v2507 = vpop.permute.xlu0 %2506
    %2508 = vrot.lane.b32.xlu0 %v2495, 30
    %v2509 = vpop.permute.xlu0 %2508
    %2510 = vrot.lane.b32.xlu0 %v2496, 30
    %v2511 = vpop.permute.xlu0 %2510
    %2512 = vrot.lane.b32.xlu0 %v2497, 30
    %v2513 = vpop.permute.xlu0 %2512
    %2514 = vrot.lane.b32.xlu0 %v2498, 30
    %v2515 = vpop.permute.xlu0 %2514
    %2516 = vrot.lane.b32.xlu0 %v2499, 30
    %v2517 = vpop.permute.xlu0 %2516
    %vm2518 = vcmask 244736
    %v2519 = vsel %vm2518, %v2507, %v2509
    %v2520 = vsel %vm2518, %v2509, %v2511
    %v2521 = vsel %vm2518, %v2513, %v2515
    %v2522 = vsel %vm2518, %v2515, %v2517
    %v2527 = vadd.f32 %v2486, %v2519
    %v2528 = vadd.f32 %v2487, %v2520
    %v2529 = vadd.f32 %v2488, %v2521
    %v2530 = vadd.f32 %v2489, %v2522
    %2531 = vset.pattern.permute.xlu0 45
    %2532 = vperm.xlu0 %2531, %v498
    %v2533 = vpop.permute.xlu0 %2532
    %v2535 = vmul.f32 %v2533, %v610
    %v2536 = vmul.f32 %v2533, %v611
    %v2537 = vmul.f32 %v2533, %v612
    %v2538 = vmul.f32 %v2533, %v613
    %v2539 = vmul.f32 %v2533, %v614
    %v2540 = vmul.f32 %v2533, %v615
    %2547 = vrot.lane.b32.xlu0 %v2535, 29
    %v2548 = vpop.permute.xlu0 %2547
    %2549 = vrot.lane.b32.xlu0 %v2536, 29
    %v2550 = vpop.permute.xlu0 %2549
    %2551 = vrot.lane.b32.xlu0 %v2537, 29
    %v2552 = vpop.permute.xlu0 %2551
    %2553 = vrot.lane.b32.xlu0 %v2538, 29
    %v2554 = vpop.permute.xlu0 %2553
    %2555 = vrot.lane.b32.xlu0 %v2539, 29
    %v2556 = vpop.permute.xlu0 %2555
    %2557 = vrot.lane.b32.xlu0 %v2540, 29
    %v2558 = vpop.permute.xlu0 %2557
    %vm2559 = vcmask 236544
    %v2560 = vsel %vm2559, %v2548, %v2550
    %v2561 = vsel %vm2559, %v2550, %v2552
    %v2562 = vsel %vm2559, %v2554, %v2556
    %v2563 = vsel %vm2559, %v2556, %v2558
    %v2568 = vadd.f32 %v2527, %v2560
    %v2569 = vadd.f32 %v2528, %v2561
    %v2570 = vadd.f32 %v2529, %v2562
    %v2571 = vadd.f32 %v2530, %v2563
    %2572 = vset.pattern.permute.xlu0 46
    %2573 = vperm.xlu0 %2572, %v498
    %v2574 = vpop.permute.xlu0 %2573
    %v2576 = vmul.f32 %v2574, %v642
    %v2577 = vmul.f32 %v2574, %v643
    %v2578 = vmul.f32 %v2574, %v644
    %v2579 = vmul.f32 %v2574, %v645
    %v2580 = vmul.f32 %v2574, %v646
    %v2581 = vmul.f32 %v2574, %v647
    %2588 = vrot.lane.b32.xlu0 %v2576, 28
    %v2589 = vpop.permute.xlu0 %2588
    %2590 = vrot.lane.b32.xlu0 %v2577, 28
    %v2591 = vpop.permute.xlu0 %2590
    %2592 = vrot.lane.b32.xlu0 %v2578, 28
    %v2593 = vpop.permute.xlu0 %2592
    %2594 = vrot.lane.b32.xlu0 %v2579, 28
    %v2595 = vpop.permute.xlu0 %2594
    %2596 = vrot.lane.b32.xlu0 %v2580, 28
    %v2597 = vpop.permute.xlu0 %2596
    %2598 = vrot.lane.b32.xlu0 %v2581, 28
    %v2599 = vpop.permute.xlu0 %2598
    %vm2600 = vcmask 228352
    %v2601 = vsel %vm2600, %v2589, %v2591
    %v2602 = vsel %vm2600, %v2591, %v2593
    %v2603 = vsel %vm2600, %v2595, %v2597
    %v2604 = vsel %vm2600, %v2597, %v2599
    %v2609 = vadd.f32 %v2568, %v2601
    %v2610 = vadd.f32 %v2569, %v2602
    %v2611 = vadd.f32 %v2570, %v2603
    %v2612 = vadd.f32 %v2571, %v2604
    %2613 = vset.pattern.permute.xlu0 47
    %2614 = vperm.xlu0 %2613, %v498
    %v2615 = vpop.permute.xlu0 %2614
    %v2617 = vmul.f32 %v2615, %v675
    %v2618 = vmul.f32 %v2615, %v676
    %v2619 = vmul.f32 %v2615, %v677
    %v2620 = vmul.f32 %v2615, %v678
    %v2621 = vmul.f32 %v2615, %v679
    %v2622 = vmul.f32 %v2615, %v680
    %2629 = vrot.lane.b32.xlu0 %v2617, 27
    %v2630 = vpop.permute.xlu0 %2629
    %2631 = vrot.lane.b32.xlu0 %v2618, 27
    %v2632 = vpop.permute.xlu0 %2631
    %2633 = vrot.lane.b32.xlu0 %v2619, 27
    %v2634 = vpop.permute.xlu0 %2633
    %2635 = vrot.lane.b32.xlu0 %v2620, 27
    %v2636 = vpop.permute.xlu0 %2635
    %2637 = vrot.lane.b32.xlu0 %v2621, 27
    %v2638 = vpop.permute.xlu0 %2637
    %2639 = vrot.lane.b32.xlu0 %v2622, 27
    %v2640 = vpop.permute.xlu0 %2639
    %vm2641 = vcmask 220160
    %v2642 = vsel %vm2641, %v2630, %v2632
    %v2643 = vsel %vm2641, %v2632, %v2634
    %v2644 = vsel %vm2641, %v2636, %v2638
    %v2645 = vsel %vm2641, %v2638, %v2640
    %v2650 = vadd.f32 %v2609, %v2642
    %v2651 = vadd.f32 %v2610, %v2643
    %v2652 = vadd.f32 %v2611, %v2644
    %v2653 = vadd.f32 %v2612, %v2645
    %2654 = vset.pattern.permute.xlu0 48
    %2655 = vperm.xlu0 %2654, %v498
    %v2656 = vpop.permute.xlu0 %2655
    %v2658 = vmul.f32 %v2656, %v708
    %v2659 = vmul.f32 %v2656, %v709
    %v2660 = vmul.f32 %v2656, %v710
    %v2661 = vmul.f32 %v2656, %v711
    %v2662 = vmul.f32 %v2656, %v712
    %v2663 = vmul.f32 %v2656, %v713
    %2670 = vrot.lane.b32.xlu0 %v2658, 26
    %v2671 = vpop.permute.xlu0 %2670
    %2672 = vrot.lane.b32.xlu0 %v2659, 26
    %v2673 = vpop.permute.xlu0 %2672
    %2674 = vrot.lane.b32.xlu0 %v2660, 26
    %v2675 = vpop.permute.xlu0 %2674
    %2676 = vrot.lane.b32.xlu0 %v2661, 26
    %v2677 = vpop.permute.xlu0 %2676
    %2678 = vrot.lane.b32.xlu0 %v2662, 26
    %v2679 = vpop.permute.xlu0 %2678
    %2680 = vrot.lane.b32.xlu0 %v2663, 26
    %v2681 = vpop.permute.xlu0 %2680
    %vm2682 = vcmask 211968
    %v2683 = vsel %vm2682, %v2671, %v2673
    %v2684 = vsel %vm2682, %v2673, %v2675
    %v2685 = vsel %vm2682, %v2677, %v2679
    %v2686 = vsel %vm2682, %v2679, %v2681
    %v2691 = vadd.f32 %v2650, %v2683
    %v2692 = vadd.f32 %v2651, %v2684
    %v2693 = vadd.f32 %v2652, %v2685
    %v2694 = vadd.f32 %v2653, %v2686
    %vm2695 = vcmask 1043456
    %v2696 = vsel %vm2695, %v2691, 0.0
    %v2697 = vrot.slane %v2696, 4
    %v2698 = vadd.f32 %v2696, %v2697
    %v2699 = vrot.slane %v2698, 2
    %v2700 = vadd.f32 %v2698, %v2699
    %v2701 = vrot.slane %v2700, 1
    %v2702 = vadd.f32 %v2700, %v2701
    %v2703 = vsel %vm2695, %v2692, 0.0
    %v2704 = vrot.slane %v2703, 4
    %v2705 = vadd.f32 %v2703, %v2704
    %v2706 = vrot.slane %v2705, 2
    %v2707 = vadd.f32 %v2705, %v2706
    %v2708 = vrot.slane %v2707, 1
    %v2709 = vadd.f32 %v2707, %v2708
    %v2710 = vsel %vm2695, %v2693, 0.0
    %v2711 = vrot.slane %v2710, 4
    %v2712 = vadd.f32 %v2710, %v2711
    %v2713 = vrot.slane %v2712, 2
    %v2714 = vadd.f32 %v2712, %v2713
    %v2715 = vrot.slane %v2714, 1
    %v2716 = vadd.f32 %v2714, %v2715
    %v2717 = vsel %vm2695, %v2694, 0.0
    %v2718 = vrot.slane %v2717, 4
    %v2719 = vadd.f32 %v2717, %v2718
    %v2720 = vrot.slane %v2719, 2
    %v2721 = vadd.f32 %v2719, %v2720
    %v2722 = vrot.slane %v2721, 1
    %v2723 = vadd.f32 %v2721, %v2722
    %s2724 = sld [smem:[#allocation8 + $0x1]]
    %v2725 = vstv %s2724
    %v2726 = vadd.f32 %v2702, %v2725
    %v2727 = vadd.f32 %v2709, %v2725
    %v2728 = vadd.f32 %v2716, %v2725
    %v2729 = vadd.f32 %v2723, %v2725
    %v2730 = vsub.f32 0.0, %v2726
    %v2731 = vsub.f32 0.0, %v2727
    %v2732 = vsub.f32 0.0, %v2728
    %v2733 = vsub.f32 0.0, %v2729
    %v2734 = vmul.f32 %v2730, 1.442695
    %v2735 = vpow.pop %v2734
    %v2736 = vmul.f32 %v2731, 1.442695
    %v2737 = vpow.pop %v2736
    %v2738 = vmul.f32 %v2732, 1.442695
    %v2739 = vpow.pop %v2738
    %v2740 = vmul.f32 %v2733, 1.442695
    %v2741 = vpow.pop %v2740
    %v2742 = vadd.f32 %v2735, 1.0
    %v2743 = vadd.f32 %v2737, 1.0
    %v2744 = vadd.f32 %v2739, 1.0
    %v2745 = vadd.f32 %v2741, 1.0
    %v2746 = vrcp.pop %v2742
    %v2747 = vmul.f32 1.0, %v2746
    %v2748 = vrcp.pop %v2743
    %v2749 = vmul.f32 1.0, %v2748
    %v2750 = vrcp.pop %v2744
    %v2751 = vmul.f32 1.0, %v2750
    %v2752 = vrcp.pop %v2745
    %v2753 = vmul.f32 1.0, %v2752
    %v2754 = vsub.f32 1.0, %v2747
    %v2755 = vsub.f32 1.0, %v2749
    %v2756 = vsub.f32 1.0, %v2751
    %v2757 = vsub.f32 1.0, %v2753
    %v2758 = vadd.f32 %v327, %v2747
    %v2759 = vadd.f32 %v327, %v2749
    %v2760 = vadd.f32 %v329, %v2747
    %v2761 = vadd.f32 %v329, %v2749
    %v2762 = vadd.f32 %v331, %v2751
    %v2763 = vadd.f32 %v331, %v2753
    %v2764 = vadd.f32 %v333, %v2751
    %v2765 = vadd.f32 %v333, %v2753
    %v2766 = vadd.f32 %v2758, 1.0
    %v2767 = vadd.f32 %v2759, 1.0
    %v2768 = vadd.f32 %v2760, 1.0
    %v2769 = vadd.f32 %v2761, 1.0
    %v2770 = vadd.f32 %v2762, 1.0
    %v2771 = vadd.f32 %v2763, 1.0
    %v2772 = vadd.f32 %v2764, 1.0
    %v2773 = vadd.f32 %v2765, 1.0
    %v2774 = vadd.f32 %v334, %v2754
    %v2775 = vadd.f32 %v334, %v2755
    %v2776 = vadd.f32 %v335, %v2754
    %v2777 = vadd.f32 %v335, %v2755
    %v2778 = vadd.f32 %v336, %v2756
    %v2779 = vadd.f32 %v336, %v2757
    %v2780 = vadd.f32 %v337, %v2756
    %v2781 = vadd.f32 %v337, %v2757
    %v2782 = vadd.f32 %v2774, 1.0
    %v2783 = vadd.f32 %v2775, 1.0
    %v2784 = vadd.f32 %v2776, 1.0
    %v2785 = vadd.f32 %v2777, 1.0
    %v2786 = vadd.f32 %v2778, 1.0
    %v2787 = vadd.f32 %v2779, 1.0
    %v2788 = vadd.f32 %v2780, 1.0
    %v2789 = vadd.f32 %v2781, 1.0
    %v2790 = vmul.f32 %v2766, %v99
    %v2791 = vmul.f32 %v2767, %v100
    %v2792 = vmul.f32 %v2768, %v101
    %v2793 = vmul.f32 %v2769, %v102
    %v2794 = vmul.f32 %v2770, %v103
    %v2795 = vmul.f32 %v2771, %v104
    %v2796 = vmul.f32 %v2772, %v105
    %v2797 = vmul.f32 %v2773, %v106
    %v2798 = vmul.f32 %v2782, %v107
    %v2799 = vmul.f32 %v2783, %v108
    %v2800 = vmul.f32 %v2784, %v109
    %v2801 = vmul.f32 %v2785, %v110
    %v2802 = vmul.f32 %v2786, %v111
    %v2803 = vmul.f32 %v2787, %v112
    %v2804 = vmul.f32 %v2788, %v113
    %v2805 = vmul.f32 %v2789, %v114
    %v2806 = vadd.f32 %v2790, %v2798
    %v2807 = vadd.f32 %v2791, %v2799
    %v2808 = vadd.f32 %v2792, %v2800
    %v2809 = vadd.f32 %v2793, %v2801
    %v2810 = vadd.f32 %v2794, %v2802
    %v2811 = vadd.f32 %v2795, %v2803
    %v2812 = vadd.f32 %v2796, %v2804
    %v2813 = vadd.f32 %v2797, %v2805
    %2814 = vst [vmem:[#allocation13] sm:$0xff] %v2806
    %2815 = vst [vmem:[#allocation13 + $0x8] sm:$0xff] %v2807
    %2816 = vst [vmem:[#allocation13 + $0x10] sm:$0xff] %v2808
    %2817 = vst [vmem:[#allocation13 + $0x18] sm:$0xff] %v2809
    %2818 = vst [vmem:[#allocation13 + $0x20] sm:$0xff] %v2810
    %2819 = vst [vmem:[#allocation13 + $0x28] sm:$0xff] %v2811
    %2820 = vst [vmem:[#allocation13 + $0x30] sm:$0xff] %v2812
    %2821 = vst [vmem:[#allocation13 + $0x38] sm:$0xff] %v2813
    // Predicated region
    $region50: #{tpu_custom_call.1} parent=1 // pred_check
      _
    $region51: #{tpu_custom_call.1} parent=1 // pred_check_branch
      %2823 = sbr.rel (0) target = $region53
    $region52: #{tpu_custom_call.1} parent=1 // pred_region
      %s2825 = ssub.s32 1024, 1024
      %2826 = vsyncadd [#allocation4], %s2825
      %s2827 = sshll.u32 [#allocation13], 4
      %s2828 = int_to_ptr.vmem [resolvable:$true] %s2827
      %2833 = dma.vmem_to_hbm [thread:$0]  %s2828, 1024, %s6, [#allocation4], 256, 256, 16
    $region53: #{tpu_custom_call.1} parent=1 // pred_fallthru
      _
    // Predicated region
    $region54: #{tpu_custom_call.1} parent=1 // pred_check
      _
    $region55: #{tpu_custom_call.1} parent=1 // pred_check_branch
      %2835 = sbr.rel (0) target = $region57
    $region56: #{tpu_custom_call.1} parent=1 // pred_region
      %2836 = dma.done [#allocation4], 1024
    $region57: #{tpu_custom_call.1} parent=1 // pred_fallthru
      _
    %2837 = vsyncpa [#allocation3], 1
    %2838 = vsyncpa [#allocation7], 1
    %2839 = vsyncpa [#allocation11], 1
    %2840 = vsyncpa [#allocation4], 1
    %2841 = vsyncpa [#allocation5], 1

</llo_original>
